<compile_context>
chip_gen: v7x
topology: tpu7x:2x2x1
jax: 0.10.0
libtpu: 0.0.40
codegen_flags: <defaults>
</compile_context>

<pallas_src>
import math

import jax
import jax.numpy as jnp
from jax.experimental import pallas as pl
from jax.experimental.pallas import tpu as pltpu

# ----- small, BERT-consistent shapes -----------------------------------------
B, S, H = 2, 8, 32          # batch, seq length, hidden size
NH = 4                      # attention heads
DH = H // NH                # head dim
FF = 4 * H                  # FFN intermediate size (=128, lane-dense)
SCALE = 1.0 / math.sqrt(DH)
EPS = 1e-12                 # BERT LayerNorm eps

# rows of the packed [8, FF] bias/gain operand
_R_BQKV, _R_BO, _R_G1, _R_BE1, _R_B1, _R_B2, _R_G2, _R_BE2 = range(8)


def encoder_layer_kernel(x_ref, wqkv_ref, wo_ref, w1_ref, w2_ref, vec_ref,
                         out_ref, ctx_ref):
    def vrow(i, n):
        # static row/width slice of the packed [8, FF] bias/gain operand
        return vec_ref[i:i + 1, :n]                          # [1, n] f32

    x = x_ref[...]                                           # [B*S, H] f32
    x_bf = x.astype(jnp.bfloat16)

    # ---- fused QKV projection: one bf16 [B*S,H] x [H,3H] matmul, f32 acc ----
    qkv = jnp.dot(x_bf, wqkv_ref[...],
                  preferred_element_type=jnp.float32)        # [B*S, 3H] f32
    qkv = qkv + vrow(_R_BQKV, 3 * H)
    qkv = qkv.astype(jnp.bfloat16).reshape(B, S, 3 * H)      # one down-cast

    # ---- multi-head self-attention (static unroll over NH=4 heads) ----
    # NOTE: 1/sqrt(DH) is already folded into the Q weights/bias at pack time.
    # TODO(synk): no attention mask — padded sequences are not handled here.
    for h in range(NH):
        q_h = qkv[:, :, h * DH:(h + 1) * DH]                      # [B,S,DH]
        k_h = qkv[:, :, H + h * DH:H + (h + 1) * DH]              # [B,S,DH]
        v_h = qkv[:, :, 2 * H + h * DH:2 * H + (h + 1) * DH]      # [B,S,DH]
        s = jnp.einsum('bqd,bkd->bqk', q_h, k_h,
                       preferred_element_type=jnp.float32)        # [B,S,S] f32
        s = s - jnp.max(s, axis=-1, keepdims=True)
        p = jnp.exp(s)
        p = p * pl.reciprocal(jnp.sum(p, axis=-1, keepdims=True), approx=True)
        ctx_h = jnp.einsum('bqk,bkd->bqd', p.astype(jnp.bfloat16), v_h,
                           preferred_element_type=jnp.float32)    # [B,S,DH]
        # lane-slice store into the ctx scratch: no per-head Wo matmul
        ctx_ref[:, h * DH:(h + 1) * DH] = (
            ctx_h.reshape(B * S, DH).astype(jnp.bfloat16))

    # single dense output projection over all heads (K = H, MXU-dense)
    attn = jnp.dot(ctx_ref[...], wo_ref[...],
                   preferred_element_type=jnp.float32) + vrow(_R_BO, H)
    # nn.Dropout in eval mode is identity -> nothing to do here.

    # ---- add & LayerNorm 1 (f32) ----
    h1 = x + attn
    mu1 = jnp.mean(h1, axis=-1, keepdims=True)
    var1 = jnp.mean(jnp.square(h1 - mu1), axis=-1, keepdims=True)
    h1 = ((h1 - mu1) * jax.lax.rsqrt(var1 + EPS) * vrow(_R_G1, H)
          + vrow(_R_BE1, H))

    # ---- feed-forward (bf16 matmuls, f32 elementwise) ----
    # TODO(synk): pretrained BERT uses the exact erf GELU; tanh approximation
    #             (EUP-friendly) is used here and deviates slightly.
    ff = jnp.dot(h1.astype(jnp.bfloat16), w1_ref[...],
                 preferred_element_type=jnp.float32) + vrow(_R_B1, FF)
    ff = jax.nn.gelu(ff, approximate=True)
    ff = jnp.dot(ff.astype(jnp.bfloat16), w2_ref[...],
                 preferred_element_type=jnp.float32) + vrow(_R_B2, H)

    # ---- add & LayerNorm 2 (f32) ----
    h2 = h1 + ff
    mu2 = jnp.mean(h2, axis=-1, keepdims=True)
    var2 = jnp.mean(jnp.square(h2 - mu2), axis=-1, keepdims=True)
    out = ((h2 - mu2) * jax.lax.rsqrt(var2 + EPS) * vrow(_R_G2, H)
           + vrow(_R_BE2, H))

    out_ref[...] = out.astype(out_ref.dtype)                 # [B*S, H]


def _pack_params(params):
    """bf16 weights; fuse Q/K/V; fold 1/sqrt(DH) into Q; pack biases/gains."""
    bf = jnp.bfloat16
    w_qkv = jnp.concatenate(
        [params["wq"] * SCALE, params["wk"], params["wv"]],
        axis=1).astype(bf)                                   # [H, 3H] bf16
    b_qkv = jnp.concatenate(
        [params["bq"] * SCALE, params["bk"], params["bv"]], axis=1)  # [1, 3H]
    rows = [b_qkv, params["bo"], params["g1"], params["be1"],
            params["b1"], params["b2"], params["g2"], params["be2"]]
    vec = jnp.concatenate(
        [jnp.pad(r, ((0, 0), (0, FF - r.shape[1]))) for r in rows],
        axis=0).astype(jnp.float32)                          # [8, FF] f32
    return [w_qkv,
            params["wo"].astype(bf),
            params["w1"].astype(bf),
            params["w2"].astype(bf),
            vec]


def dge2e_encode(x, params):
    """x: [B, S, H] float32 -> [B, S, H] float32 (one BERT encoder layer)."""
    flat = _pack_params(params)
    vmem = pl.BlockSpec(memory_space=pltpu.MemorySpace.VMEM)
    fn = pl.pallas_call(
        encoder_layer_kernel,
        out_shape=jax.ShapeDtypeStruct((B * S, H), x.dtype),
        in_specs=[vmem] * (1 + len(flat)),
        out_specs=vmem,
        scratch_shapes=[pltpu.VMEM((B * S, H), jnp.bfloat16)],  # ctx scratch
    )
    out = fn(x.reshape(B * S, H), *flat)
    return out.reshape(B, S, H)


def init_params(key):
    ks = jax.random.split(key, 8)
    std = 0.02
    return {
        "wq": jax.random.normal(ks[0], (H, H), jnp.float32) * std,
        "bq": jnp.zeros((1, H), jnp.float32),
        "wk": jax.random.normal(ks[1], (H, H), jnp.float32) * std,
        "bk": jnp.zeros((1, H), jnp.float32),
        "wv": jax.random.normal(ks[2], (H, H), jnp.float32) * std,
        "bv": jnp.zeros((1, H), jnp.float32),
        "wo": jax.random.normal(ks[3], (H, H), jnp.float32) * std,
        "bo": jnp.zeros((1, H), jnp.float32),
        "g1": jnp.ones((1, H), jnp.float32),
        "be1": jnp.zeros((1, H), jnp.float32),
        "w1": jax.random.normal(ks[4], (H, FF), jnp.float32) * std,
        "b1": jnp.zeros((1, FF), jnp.float32),
        "w2": jax.random.normal(ks[5], (FF, H), jnp.float32) * std,
        "b2": jnp.zeros((1, H), jnp.float32),
        "g2": jnp.ones((1, H), jnp.float32),
        "be2": jnp.zeros((1, H), jnp.float32),
    }


if __name__ == "__main__":
    key = jax.random.PRNGKey(0)
    k_x, k_p = jax.random.split(key)
    x = jax.random.normal(k_x, (B, S, H), jnp.float32)
    params = init_params(k_p)

    out = dge2e_encode(x, params)
    jax.block_until_ready(out)
    assert out.shape == (B, S, H) and out.dtype == jnp.float32
    assert bool(jnp.all(jnp.isfinite(out)))
    print("KERNEL_OK")
</pallas_src>

<mosaic_0001>
module attributes {stable_mosaic.version = 11 : i64} {
  func.func @encoder_layer_kernel(%arg0: memref<16x32xf32, #tpu.memory_space<vmem>>, %arg1: memref<32x96xbf16, #tpu.memory_space<vmem>>, %arg2: memref<32x32xbf16, #tpu.memory_space<vmem>>, %arg3: memref<32x128xbf16, #tpu.memory_space<vmem>>, %arg4: memref<128x32xbf16, #tpu.memory_space<vmem>>, %arg5: memref<8x128xf32, #tpu.memory_space<vmem>>, %arg6: memref<16x32xf32, #tpu.memory_space<vmem>>, %arg7: memref<16x32xbf16, #tpu.memory_space<vmem>>) attributes {dimension_semantics = [], scalar_prefetch = 0 : i64, scratch_operands = 1 : i64, tpu.core_type = #tpu.core_type<tc>} {
    %c0 = arith.constant 0 : index
    %c0_0 = arith.constant 0 : index
    %0 = vector.load %arg0[%c0, %c0_0] : memref<16x32xf32, #tpu.memory_space<vmem>>, vector<16x32xf32>
    %1 = arith.truncf %0 : vector<16x32xf32> to vector<16x32xbf16>
    %c0_1 = arith.constant 0 : index
    %c0_2 = arith.constant 0 : index
    %2 = vector.load %arg1[%c0_1, %c0_2] : memref<32x96xbf16, #tpu.memory_space<vmem>>, vector<32x96xbf16>
    %cst = arith.constant dense<0.000000e+00> : vector<16x96xf32>
    %3 = tpu.matmul %1, %2, %cst {dimension_numbers = #tpu.dot_dimension_numbers<[1], [0], [0], [1], [0, 0, 1, 1], [], []>} : vector<16x32xbf16>, vector<32x96xbf16>, vector<16x96xf32> -> vector<16x96xf32>
    %c0_3 = arith.constant 0 : index
    %c0_4 = arith.constant 0 : index
    %4 = vector.load %arg5[%c0_3, %c0_4] : memref<8x128xf32, #tpu.memory_space<vmem>>, vector<1x96xf32>
    %5 = vector.broadcast %4 : vector<1x96xf32> to vector<16x96xf32>
    %6 = arith.addf %3, %5 : vector<16x96xf32>
    %7 = arith.truncf %6 : vector<16x96xf32> to vector<16x96xbf16>
    %8 = vector.shape_cast %7 : vector<16x96xbf16> to vector<2x8x96xbf16>
    %9 = vector.extract_strided_slice %8 {offsets = [0, 0, 0], sizes = [2, 8, 8], strides = [1, 1, 1]} : vector<2x8x96xbf16> to vector<2x8x8xbf16>
    %10 = vector.extract_strided_slice %8 {offsets = [0, 0, 32], sizes = [2, 8, 8], strides = [1, 1, 1]} : vector<2x8x96xbf16> to vector<2x8x8xbf16>
    %11 = vector.extract_strided_slice %8 {offsets = [0, 0, 64], sizes = [2, 8, 8], strides = [1, 1, 1]} : vector<2x8x96xbf16> to vector<2x8x8xbf16>
    "tpu.trace_start"() <{level = 10 : i32, message = "bqd,bkd->bqk"}> : () -> ()
    %cst_5 = arith.constant dense<0.000000e+00> : vector<2x8x8xf32>
    %12 = tpu.matmul %9, %10, %cst_5 {dimension_numbers = #tpu.dot_dimension_numbers<[2], [2], [1], [1], [0, 0, 0, 1, 1, 1], [0], [0]>} : vector<2x8x8xbf16>, vector<2x8x8xbf16>, vector<2x8x8xf32> -> vector<2x8x8xf32>
    "tpu.trace_stop"() : () -> ()
    %cst_6 = arith.constant dense<0xFF800000> : vector<2x8xf32>
    %13 = vector.multi_reduction <maximumf>, %12, %cst_6 [2] : vector<2x8x8xf32> to vector<2x8xf32>
    %14 = vector.shape_cast %13 : vector<2x8xf32> to vector<2x8x1xf32>
    %15 = vector.broadcast %14 : vector<2x8x1xf32> to vector<2x8x8xf32>
    %16 = arith.subf %12, %15 : vector<2x8x8xf32>
    %17 = math.exp %16 : vector<2x8x8xf32>
    %cst_7 = arith.constant dense<0.000000e+00> : vector<2x8xf32>
    %18 = vector.multi_reduction <add>, %17, %cst_7 [2] : vector<2x8x8xf32> to vector<2x8xf32>
    %19 = vector.shape_cast %18 : vector<2x8xf32> to vector<2x8x1xf32>
    %20 = tpu.reciprocal %19 {approx = true} : vector<2x8x1xf32> -> vector<2x8x1xf32>
    %21 = vector.broadcast %20 : vector<2x8x1xf32> to vector<2x8x8xf32>
    %22 = arith.mulf %17, %21 : vector<2x8x8xf32>
    %23 = arith.truncf %22 : vector<2x8x8xf32> to vector<2x8x8xbf16>
    "tpu.trace_start"() <{level = 10 : i32, message = "bqk,bkd->bqd"}> : () -> ()
    %cst_8 = arith.constant dense<0.000000e+00> : vector<2x8x8xf32>
    %24 = tpu.matmul %23, %11, %cst_8 {dimension_numbers = #tpu.dot_dimension_numbers<[2], [1], [1], [2], [0, 0, 0, 1, 1, 2], [0], [0]>} : vector<2x8x8xbf16>, vector<2x8x8xbf16>, vector<2x8x8xf32> -> vector<2x8x8xf32>
    "tpu.trace_stop"() : () -> ()
    %25 = vector.shape_cast %24 : vector<2x8x8xf32> to vector<16x8xf32>
    %26 = arith.truncf %25 : vector<16x8xf32> to vector<16x8xbf16>
    %c0_9 = arith.constant 0 : index
    %c0_10 = arith.constant 0 : index
    %27 = vector.load %arg7[%c0_9, %c0_10] : memref<16x32xbf16, #tpu.memory_space<vmem>>, vector<16x8xbf16>
    tpu.vector_store %arg7[%c0_9, %c0_10], %26 {strides = array<i32>} : memref<16x32xbf16, #tpu.memory_space<vmem>>, vector<16x8xbf16>,
    %28 = vector.extract_strided_slice %8 {offsets = [0, 0, 8], sizes = [2, 8, 8], strides = [1, 1, 1]} : vector<2x8x96xbf16> to vector<2x8x8xbf16>
    %29 = vector.extract_strided_slice %8 {offsets = [0, 0, 40], sizes = [2, 8, 8], strides = [1, 1, 1]} : vector<2x8x96xbf16> to vector<2x8x8xbf16>
    %30 = vector.extract_strided_slice %8 {offsets = [0, 0, 72], sizes = [2, 8, 8], strides = [1, 1, 1]} : vector<2x8x96xbf16> to vector<2x8x8xbf16>
    "tpu.trace_start"() <{level = 10 : i32, message = "bqd,bkd->bqk"}> : () -> ()
    %cst_11 = arith.constant dense<0.000000e+00> : vector<2x8x8xf32>
    %31 = tpu.matmul %28, %29, %cst_11 {dimension_numbers = #tpu.dot_dimension_numbers<[2], [2], [1], [1], [0, 0, 0, 1, 1, 1], [0], [0]>} : vector<2x8x8xbf16>, vector<2x8x8xbf16>, vector<2x8x8xf32> -> vector<2x8x8xf32>
    "tpu.trace_stop"() : () -> ()
    %cst_12 = arith.constant dense<0xFF800000> : vector<2x8xf32>
    %32 = vector.multi_reduction <maximumf>, %31, %cst_12 [2] : vector<2x8x8xf32> to vector<2x8xf32>
    %33 = vector.shape_cast %32 : vector<2x8xf32> to vector<2x8x1xf32>
    %34 = vector.broadcast %33 : vector<2x8x1xf32> to vector<2x8x8xf32>
    %35 = arith.subf %31, %34 : vector<2x8x8xf32>
    %36 = math.exp %35 : vector<2x8x8xf32>
    %cst_13 = arith.constant dense<0.000000e+00> : vector<2x8xf32>
    %37 = vector.multi_reduction <add>, %36, %cst_13 [2] : vector<2x8x8xf32> to vector<2x8xf32>
    %38 = vector.shape_cast %37 : vector<2x8xf32> to vector<2x8x1xf32>
    %39 = tpu.reciprocal %38 {approx = true} : vector<2x8x1xf32> -> vector<2x8x1xf32>
    %40 = vector.broadcast %39 : vector<2x8x1xf32> to vector<2x8x8xf32>
    %41 = arith.mulf %36, %40 : vector<2x8x8xf32>
    %42 = arith.truncf %41 : vector<2x8x8xf32> to vector<2x8x8xbf16>
    "tpu.trace_start"() <{level = 10 : i32, message = "bqk,bkd->bqd"}> : () -> ()
    %cst_14 = arith.constant dense<0.000000e+00> : vector<2x8x8xf32>
    %43 = tpu.matmul %42, %30, %cst_14 {dimension_numbers = #tpu.dot_dimension_numbers<[2], [1], [1], [2], [0, 0, 0, 1, 1, 2], [0], [0]>} : vector<2x8x8xbf16>, vector<2x8x8xbf16>, vector<2x8x8xf32> -> vector<2x8x8xf32>
    "tpu.trace_stop"() : () -> ()
    %44 = vector.shape_cast %43 : vector<2x8x8xf32> to vector<16x8xf32>
    %45 = arith.truncf %44 : vector<16x8xf32> to vector<16x8xbf16>
    %c0_15 = arith.constant 0 : index
    %c8 = arith.constant 8 : index
    %46 = vector.load %arg7[%c0_15, %c8] : memref<16x32xbf16, #tpu.memory_space<vmem>>, vector<16x8xbf16>
    tpu.vector_store %arg7[%c0_15, %c8], %45 {strides = array<i32>} : memref<16x32xbf16, #tpu.memory_space<vmem>>, vector<16x8xbf16>,
    %47 = vector.extract_strided_slice %8 {offsets = [0, 0, 16], sizes = [2, 8, 8], strides = [1, 1, 1]} : vector<2x8x96xbf16> to vector<2x8x8xbf16>
    %48 = vector.extract_strided_slice %8 {offsets = [0, 0, 48], sizes = [2, 8, 8], strides = [1, 1, 1]} : vector<2x8x96xbf16> to vector<2x8x8xbf16>
    %49 = vector.extract_strided_slice %8 {offsets = [0, 0, 80], sizes = [2, 8, 8], strides = [1, 1, 1]} : vector<2x8x96xbf16> to vector<2x8x8xbf16>
    "tpu.trace_start"() <{level = 10 : i32, message = "bqd,bkd->bqk"}> : () -> ()
    %cst_16 = arith.constant dense<0.000000e+00> : vector<2x8x8xf32>
    %50 = tpu.matmul %47, %48, %cst_16 {dimension_numbers = #tpu.dot_dimension_numbers<[2], [2], [1], [1], [0, 0, 0, 1, 1, 1], [0], [0]>} : vector<2x8x8xbf16>, vector<2x8x8xbf16>, vector<2x8x8xf32> -> vector<2x8x8xf32>
    "tpu.trace_stop"() : () -> ()
    %cst_17 = arith.constant dense<0xFF800000> : vector<2x8xf32>
    %51 = vector.multi_reduction <maximumf>, %50, %cst_17 [2] : vector<2x8x8xf32> to vector<2x8xf32>
    %52 = vector.shape_cast %51 : vector<2x8xf32> to vector<2x8x1xf32>
    %53 = vector.broadcast %52 : vector<2x8x1xf32> to vector<2x8x8xf32>
    %54 = arith.subf %50, %53 : vector<2x8x8xf32>
    %55 = math.exp %54 : vector<2x8x8xf32>
    %cst_18 = arith.constant dense<0.000000e+00> : vector<2x8xf32>
    %56 = vector.multi_reduction <add>, %55, %cst_18 [2] : vector<2x8x8xf32> to vector<2x8xf32>
    %57 = vector.shape_cast %56 : vector<2x8xf32> to vector<2x8x1xf32>
    %58 = tpu.reciprocal %57 {approx = true} : vector<2x8x1xf32> -> vector<2x8x1xf32>
    %59 = vector.broadcast %58 : vector<2x8x1xf32> to vector<2x8x8xf32>
    %60 = arith.mulf %55, %59 : vector<2x8x8xf32>
    %61 = arith.truncf %60 : vector<2x8x8xf32> to vector<2x8x8xbf16>
    "tpu.trace_start"() <{level = 10 : i32, message = "bqk,bkd->bqd"}> : () -> ()
    %cst_19 = arith.constant dense<0.000000e+00> : vector<2x8x8xf32>
    %62 = tpu.matmul %61, %49, %cst_19 {dimension_numbers = #tpu.dot_dimension_numbers<[2], [1], [1], [2], [0, 0, 0, 1, 1, 2], [0], [0]>} : vector<2x8x8xbf16>, vector<2x8x8xbf16>, vector<2x8x8xf32> -> vector<2x8x8xf32>
    "tpu.trace_stop"() : () -> ()
    %63 = vector.shape_cast %62 : vector<2x8x8xf32> to vector<16x8xf32>
    %64 = arith.truncf %63 : vector<16x8xf32> to vector<16x8xbf16>
    %c0_20 = arith.constant 0 : index
    %c16 = arith.constant 16 : index
    %65 = vector.load %arg7[%c0_20, %c16] : memref<16x32xbf16, #tpu.memory_space<vmem>>, vector<16x8xbf16>
    tpu.vector_store %arg7[%c0_20, %c16], %64 {strides = array<i32>} : memref<16x32xbf16, #tpu.memory_space<vmem>>, vector<16x8xbf16>,
    %66 = vector.extract_strided_slice %8 {offsets = [0, 0, 24], sizes = [2, 8, 8], strides = [1, 1, 1]} : vector<2x8x96xbf16> to vector<2x8x8xbf16>
    %67 = vector.extract_strided_slice %8 {offsets = [0, 0, 56], sizes = [2, 8, 8], strides = [1, 1, 1]} : vector<2x8x96xbf16> to vector<2x8x8xbf16>
    %68 = vector.extract_strided_slice %8 {offsets = [0, 0, 88], sizes = [2, 8, 8], strides = [1, 1, 1]} : vector<2x8x96xbf16> to vector<2x8x8xbf16>
    "tpu.trace_start"() <{level = 10 : i32, message = "bqd,bkd->bqk"}> : () -> ()
    %cst_21 = arith.constant dense<0.000000e+00> : vector<2x8x8xf32>
    %69 = tpu.matmul %66, %67, %cst_21 {dimension_numbers = #tpu.dot_dimension_numbers<[2], [2], [1], [1], [0, 0, 0, 1, 1, 1], [0], [0]>} : vector<2x8x8xbf16>, vector<2x8x8xbf16>, vector<2x8x8xf32> -> vector<2x8x8xf32>
    "tpu.trace_stop"() : () -> ()
    %cst_22 = arith.constant dense<0xFF800000> : vector<2x8xf32>
    %70 = vector.multi_reduction <maximumf>, %69, %cst_22 [2] : vector<2x8x8xf32> to vector<2x8xf32>
    %71 = vector.shape_cast %70 : vector<2x8xf32> to vector<2x8x1xf32>
    %72 = vector.broadcast %71 : vector<2x8x1xf32> to vector<2x8x8xf32>
    %73 = arith.subf %69, %72 : vector<2x8x8xf32>
    %74 = math.exp %73 : vector<2x8x8xf32>
    %cst_23 = arith.constant dense<0.000000e+00> : vector<2x8xf32>
    %75 = vector.multi_reduction <add>, %74, %cst_23 [2] : vector<2x8x8xf32> to vector<2x8xf32>
    %76 = vector.shape_cast %75 : vector<2x8xf32> to vector<2x8x1xf32>
    %77 = tpu.reciprocal %76 {approx = true} : vector<2x8x1xf32> -> vector<2x8x1xf32>
    %78 = vector.broadcast %77 : vector<2x8x1xf32> to vector<2x8x8xf32>
    %79 = arith.mulf %74, %78 : vector<2x8x8xf32>
    %80 = arith.truncf %79 : vector<2x8x8xf32> to vector<2x8x8xbf16>
    "tpu.trace_start"() <{level = 10 : i32, message = "bqk,bkd->bqd"}> : () -> ()
    %cst_24 = arith.constant dense<0.000000e+00> : vector<2x8x8xf32>
    %81 = tpu.matmul %80, %68, %cst_24 {dimension_numbers = #tpu.dot_dimension_numbers<[2], [1], [1], [2], [0, 0, 0, 1, 1, 2], [0], [0]>} : vector<2x8x8xbf16>, vector<2x8x8xbf16>, vector<2x8x8xf32> -> vector<2x8x8xf32>
    "tpu.trace_stop"() : () -> ()
    %82 = vector.shape_cast %81 : vector<2x8x8xf32> to vector<16x8xf32>
    %83 = arith.truncf %82 : vector<16x8xf32> to vector<16x8xbf16>
    %c0_25 = arith.constant 0 : index
    %c24 = arith.constant 24 : index
    %84 = vector.load %arg7[%c0_25, %c24] : memref<16x32xbf16, #tpu.memory_space<vmem>>, vector<16x8xbf16>
    tpu.vector_store %arg7[%c0_25, %c24], %83 {strides = array<i32>} : memref<16x32xbf16, #tpu.memory_space<vmem>>, vector<16x8xbf16>,
    %c0_26 = arith.constant 0 : index
    %c0_27 = arith.constant 0 : index
    %85 = vector.load %arg7[%c0_26, %c0_27] : memref<16x32xbf16, #tpu.memory_space<vmem>>, vector<16x32xbf16>
    %c0_28 = arith.constant 0 : index
    %c0_29 = arith.constant 0 : index
    %86 = vector.load %arg2[%c0_28, %c0_29] : memref<32x32xbf16, #tpu.memory_space<vmem>>, vector<32x32xbf16>
    %cst_30 = arith.constant dense<0.000000e+00> : vector<16x32xf32>
    %87 = tpu.matmul %85, %86, %cst_30 {dimension_numbers = #tpu.dot_dimension_numbers<[1], [0], [0], [1], [0, 0, 1, 1], [], []>} : vector<16x32xbf16>, vector<32x32xbf16>, vector<16x32xf32> -> vector<16x32xf32>
    %c1 = arith.constant 1 : index
    %c0_31 = arith.constant 0 : index
    %88 = vector.load %arg5[%c1, %c0_31] : memref<8x128xf32, #tpu.memory_space<vmem>>, vector<1x32xf32>
    %89 = vector.broadcast %88 : vector<1x32xf32> to vector<16x32xf32>
    %90 = arith.addf %87, %89 : vector<16x32xf32>
    %91 = arith.addf %0, %90 : vector<16x32xf32>
    %cst_32 = arith.constant dense<0.000000e+00> : vector<16xf32>
    %92 = vector.multi_reduction <add>, %91, %cst_32 [1] : vector<16x32xf32> to vector<16xf32>
    %93 = vector.shape_cast %92 : vector<16xf32> to vector<16x1xf32>
    %cst_33 = arith.constant 3.200000e+01 : f32
    %94 = vector.broadcast %cst_33 : f32 to vector<16x1xf32>
    %95 = arith.divf %93, %94 : vector<16x1xf32>
    %96 = vector.broadcast %95 : vector<16x1xf32> to vector<16x32xf32>
    %97 = arith.subf %91, %96 : vector<16x32xf32>
    %98 = arith.mulf %97, %97 : vector<16x32xf32>
    %cst_34 = arith.constant dense<0.000000e+00> : vector<16xf32>
    %99 = vector.multi_reduction <add>, %98, %cst_34 [1] : vector<16x32xf32> to vector<16xf32>
    %100 = vector.shape_cast %99 : vector<16xf32> to vector<16x1xf32>
    %cst_35 = arith.constant 3.200000e+01 : f32
    %101 = vector.broadcast %cst_35 : f32 to vector<16x1xf32>
    %102 = arith.divf %100, %101 : vector<16x1xf32>
    %103 = vector.broadcast %95 : vector<16x1xf32> to vector<16x32xf32>
    %104 = arith.subf %91, %103 : vector<16x32xf32>
    %cst_36 = arith.constant 9.99999996E-13 : f32
    %105 = vector.broadcast %cst_36 : f32 to vector<16x1xf32>
    %106 = arith.addf %102, %105 : vector<16x1xf32>
    %107 = math.rsqrt %106 : vector<16x1xf32>
    %108 = vector.broadcast %107 : vector<16x1xf32> to vector<16x32xf32>
    %109 = arith.mulf %104, %108 : vector<16x32xf32>
    %c2 = arith.constant 2 : index
    %c0_37 = arith.constant 0 : index
    %110 = vector.load %arg5[%c2, %c0_37] : memref<8x128xf32, #tpu.memory_space<vmem>>, vector<1x32xf32>
    %111 = vector.broadcast %110 : vector<1x32xf32> to vector<16x32xf32>
    %112 = arith.mulf %109, %111 : vector<16x32xf32>
    %c3 = arith.constant 3 : index
    %c0_38 = arith.constant 0 : index
    %113 = vector.load %arg5[%c3, %c0_38] : memref<8x128xf32, #tpu.memory_space<vmem>>, vector<1x32xf32>
    %114 = vector.broadcast %113 : vector<1x32xf32> to vector<16x32xf32>
    %115 = arith.addf %112, %114 : vector<16x32xf32>
    %116 = arith.truncf %115 : vector<16x32xf32> to vector<16x32xbf16>
    %c0_39 = arith.constant 0 : index
    %c0_40 = arith.constant 0 : index
    %117 = vector.load %arg3[%c0_39, %c0_40] : memref<32x128xbf16, #tpu.memory_space<vmem>>, vector<32x128xbf16>
    %cst_41 = arith.constant dense<0.000000e+00> : vector<16x128xf32>
    %118 = tpu.matmul %116, %117, %cst_41 {dimension_numbers = #tpu.dot_dimension_numbers<[1], [0], [0], [1], [0, 0, 1, 1], [], []>} : vector<16x32xbf16>, vector<32x128xbf16>, vector<16x128xf32> -> vector<16x128xf32>
    %c4 = arith.constant 4 : index
    %c0_42 = arith.constant 0 : index
    %119 = vector.load %arg5[%c4, %c0_42] : memref<8x128xf32, #tpu.memory_space<vmem>>, vector<1x128xf32>
    %120 = vector.broadcast %119 : vector<1x128xf32> to vector<16x128xf32>
    %121 = arith.addf %118, %120 : vector<16x128xf32>
    %122 = arith.mulf %121, %121 : vector<16x128xf32>
    %123 = arith.mulf %121, %122 : vector<16x128xf32>
    %cst_43 = arith.constant 4.471500e-02 : f32
    %124 = vector.broadcast %cst_43 : f32 to vector<16x128xf32>
    %125 = arith.mulf %124, %123 : vector<16x128xf32>
    %126 = arith.addf %121, %125 : vector<16x128xf32>
    %cst_44 = arith.constant 0.797884583 : f32
    %127 = vector.broadcast %cst_44 : f32 to vector<16x128xf32>
    %128 = arith.mulf %127, %126 : vector<16x128xf32>
    %129 = math.tanh %128 : vector<16x128xf32>
    %cst_45 = arith.constant 1.000000e+00 : f32
    %130 = vector.broadcast %cst_45 : f32 to vector<16x128xf32>
    %131 = arith.addf %130, %129 : vector<16x128xf32>
    %cst_46 = arith.constant 5.000000e-01 : f32
    %132 = vector.broadcast %cst_46 : f32 to vector<16x128xf32>
    %133 = arith.mulf %132, %131 : vector<16x128xf32>
    %134 = arith.mulf %121, %133 : vector<16x128xf32>
    %135 = arith.truncf %134 : vector<16x128xf32> to vector<16x128xbf16>
    %c0_47 = arith.constant 0 : index
    %c0_48 = arith.constant 0 : index
    %136 = vector.load %arg4[%c0_47, %c0_48] : memref<128x32xbf16, #tpu.memory_space<vmem>>, vector<128x32xbf16>
    %cst_49 = arith.constant dense<0.000000e+00> : vector<16x32xf32>
    %137 = tpu.matmul %135, %136, %cst_49 {dimension_numbers = #tpu.dot_dimension_numbers<[1], [0], [0], [1], [0, 0, 1, 1], [], []>} : vector<16x128xbf16>, vector<128x32xbf16>, vector<16x32xf32> -> vector<16x32xf32>
    %c5 = arith.constant 5 : index
    %c0_50 = arith.constant 0 : index
    %138 = vector.load %arg5[%c5, %c0_50] : memref<8x128xf32, #tpu.memory_space<vmem>>, vector<1x32xf32>
    %139 = vector.broadcast %138 : vector<1x32xf32> to vector<16x32xf32>
    %140 = arith.addf %137, %139 : vector<16x32xf32>
    %141 = arith.addf %115, %140 : vector<16x32xf32>
    %cst_51 = arith.constant dense<0.000000e+00> : vector<16xf32>
    %142 = vector.multi_reduction <add>, %141, %cst_51 [1] : vector<16x32xf32> to vector<16xf32>
    %143 = vector.shape_cast %142 : vector<16xf32> to vector<16x1xf32>
    %cst_52 = arith.constant 3.200000e+01 : f32
    %144 = vector.broadcast %cst_52 : f32 to vector<16x1xf32>
    %145 = arith.divf %143, %144 : vector<16x1xf32>
    %146 = vector.broadcast %145 : vector<16x1xf32> to vector<16x32xf32>
    %147 = arith.subf %141, %146 : vector<16x32xf32>
    %148 = arith.mulf %147, %147 : vector<16x32xf32>
    %cst_53 = arith.constant dense<0.000000e+00> : vector<16xf32>
    %149 = vector.multi_reduction <add>, %148, %cst_53 [1] : vector<16x32xf32> to vector<16xf32>
    %150 = vector.shape_cast %149 : vector<16xf32> to vector<16x1xf32>
    %cst_54 = arith.constant 3.200000e+01 : f32
    %151 = vector.broadcast %cst_54 : f32 to vector<16x1xf32>
    %152 = arith.divf %150, %151 : vector<16x1xf32>
    %153 = vector.broadcast %145 : vector<16x1xf32> to vector<16x32xf32>
    %154 = arith.subf %141, %153 : vector<16x32xf32>
    %cst_55 = arith.constant 9.99999996E-13 : f32
    %155 = vector.broadcast %cst_55 : f32 to vector<16x1xf32>
    %156 = arith.addf %152, %155 : vector<16x1xf32>
    %157 = math.rsqrt %156 : vector<16x1xf32>
    %158 = vector.broadcast %157 : vector<16x1xf32> to vector<16x32xf32>
    %159 = arith.mulf %154, %158 : vector<16x32xf32>
    %c6 = arith.constant 6 : index
    %c0_56 = arith.constant 0 : index
    %160 = vector.load %arg5[%c6, %c0_56] : memref<8x128xf32, #tpu.memory_space<vmem>>, vector<1x32xf32>
    %161 = vector.broadcast %160 : vector<1x32xf32> to vector<16x32xf32>
    %162 = arith.mulf %159, %161 : vector<16x32xf32>
    %c7 = arith.constant 7 : index
    %c0_57 = arith.constant 0 : index
    %163 = vector.load %arg5[%c7, %c0_57] : memref<8x128xf32, #tpu.memory_space<vmem>>, vector<1x32xf32>
    %164 = vector.broadcast %163 : vector<1x32xf32> to vector<16x32xf32>
    %165 = arith.addf %162, %164 : vector<16x32xf32>
    %c0_58 = arith.constant 0 : index
    %c0_59 = arith.constant 0 : index
    %166 = vector.load %arg6[%c0_58, %c0_59] : memref<16x32xf32, #tpu.memory_space<vmem>>, vector<16x32xf32>
    tpu.vector_store %arg6[%c0_58, %c0_59], %165 {strides = array<i32>} : memref<16x32xf32, #tpu.memory_space<vmem>>, vector<16x32xf32>,
    return
  }
}

</mosaic_0001>

<llo_original>
// kernel: tpu_custom_call.1
$region0: #{tpu_custom_call.1}
  #allocation0 [shape = 'u32[]', space=smem, size = 0x4, offset = 0x4, fixed_abs, tag = 'smem constant byte address 0x4 - core index']
  #allocation1 [shape = 'u32[144,128]{1,0:T(1,128)}', space=vmem, size = 0x12000, scoped, tag = 'internal scratch']
  #allocation2 [shape = 'bf16[16,32]{1,0:T(16,128)(2,1)}', space=vmem, size = 0x1000, scoped, tag = 'scratch operand']
  %s0 = inlined_call_operand.vmem [shape: f32[16,32], index: 0, kind: input, shape index: {}]
  %s1 = inlined_call_operand.vmem [shape: bf16[32,96], index: 1, kind: input, shape index: {}]
  %s2 = inlined_call_operand.vmem [shape: bf16[32,32], index: 2, kind: input, shape index: {}]
  %s3 = inlined_call_operand.vmem [shape: bf16[32,128], index: 3, kind: input, shape index: {}]
  %s4 = inlined_call_operand.vmem [shape: bf16[128,32], index: 4, kind: input, shape index: {}]
  %s5 = inlined_call_operand.vmem [shape: f32[8,128], index: 5, kind: input, shape index: {}]
  %s6 = inlined_call_operand.hbm [shape: f32[16,32], index: 6, kind: output, shape index: {}]
  %s7 = sld [smem:[#allocation0]]
  $region34: #{tpu_custom_call.1} parent=0
    _
  %s9 = ssub.s32 1, %s7
  %s10 = scalar_select 0, %s9, %s7
  $region1: #{tpu_custom_call.1} parent=0
    #allocation3 [shape = 'u8[8192]{0}', space=vmem, size = 0x2000, scoped, tag = 'output window, operand 0, single buffered']
    #allocation4 [shape = 's32[1]{0}', space=sflag, size = 0x4, scoped, tag = 'scoped memory for tpu_custom_call.1']
    %11 = vsyncpa [#allocation4], 0
    // Predicated region
    $region2: #{tpu_custom_call.1} parent=1 // pred_check
      _
    $region3: #{tpu_custom_call.1} parent=1 // pred_check_branch
      %13 = sbr.rel (0) target = $region5
    $region4: #{tpu_custom_call.1} parent=1 // pred_region
      _
    $region5: #{tpu_custom_call.1} parent=1 // pred_fallthru
      _
    // Predicated region
    $region6: #{tpu_custom_call.1} parent=1 // pred_check
      _
    $region7: #{tpu_custom_call.1} parent=1 // pred_check_branch
      %15 = sbr.rel (0) target = $region9
    $region8: #{tpu_custom_call.1} parent=1 // pred_region
      _
    $region9: #{tpu_custom_call.1} parent=1 // pred_fallthru
      _
    // Predicated region
    $region10: #{tpu_custom_call.1} parent=1 // pred_check
      _
    $region11: #{tpu_custom_call.1} parent=1 // pred_check_branch
      %17 = sbr.rel (0) target = $region13
    $region12: #{tpu_custom_call.1} parent=1 // pred_region
      _
    $region13: #{tpu_custom_call.1} parent=1 // pred_fallthru
      _
    // Predicated region
    $region14: #{tpu_custom_call.1} parent=1 // pred_check
      _
    $region15: #{tpu_custom_call.1} parent=1 // pred_check_branch
      %19 = sbr.rel (0) target = $region17
    $region16: #{tpu_custom_call.1} parent=1 // pred_region
      _
    $region17: #{tpu_custom_call.1} parent=1 // pred_fallthru
      _
    // Predicated region
    $region18: #{tpu_custom_call.1} parent=1 // pred_check
      _
    $region19: #{tpu_custom_call.1} parent=1 // pred_check_branch
      %21 = sbr.rel (0) target = $region21
    $region20: #{tpu_custom_call.1} parent=1 // pred_region
      _
    $region21: #{tpu_custom_call.1} parent=1 // pred_fallthru
      _
    // Predicated region
    $region22: #{tpu_custom_call.1} parent=1 // pred_check
      _
    $region23: #{tpu_custom_call.1} parent=1 // pred_check_branch
      %23 = sbr.rel (0) target = $region25
    $region24: #{tpu_custom_call.1} parent=1 // pred_region
      _
    $region25: #{tpu_custom_call.1} parent=1 // pred_fallthru
      _
    %v25 = vld [vmem:[%s0] sm:$0xff]
    %v26 = vld [vmem:[%s0 + $0x8] sm:$0xff]
    %v27 = vpack.c.bf16 %v26, %v25
    %v28 = vld [vmem:[%s1] sm:$0xf]
    %v29 = vld [vmem:[%s1 + $0x4] sm:$0xf]
    %v30 = vld [vmem:[%s1 + $0x8] sm:$0xf]
    %v31 = vld [vmem:[%s1 + $0xc] sm:$0xf]
    %v32 = vld [vmem:[%s5] sm:$0x1]
    %v33 = vlaneseq
    %v34 = vshrl.u32 %v33, 7
    %v35 = vsub.s32 0, %v34
    %v36 = vrot.slane %v32, %v35
    %v41 = vunpack.c.l.b16 %v28
    %v42 = vunpack.c.l.b16 %v29
    %v43 = vunpack.c.l.b16 %v30
    %v44 = vunpack.c.l.b16 %v31
    %v45 = vpack.c.b16 %v42, %v41
    %v46 = vpack.c.b16 %v44, %v43
    %vm49 = vcmask 261120
    %v51 = vsel %vm49, %v27, 0
    %53 = vmatprep.subr.bf16.mxu0 0
    %54 = vmatpush1.bf16.msra.mxu0 %v45
    %55 = vmatprep.subr.bf16.mxu0 0
    %56 = vmatpush1.bf16.msra.mxu0 %v46
    %57 = vmatprep.subr.bf16.mxu0 0
    %58 = vmatpush1.bf16.msra.mxu0 0
    %59 = vmatprep.subr.bf16.mxu0 0
    %60 = vmatpush1.bf16.msra.mxu0 0
    %61 = vmatprep.subr.bf16.mxu0 0
    %62 = vmatpush1.bf16.msra.mxu0 0
    %63 = vmatprep.subr.bf16.mxu0 0
    %64 = vmatpush1.bf16.msra.mxu0 0
    %65 = vmatprep.subr.bf16.mxu0 0
    %66 = vmatpush1.bf16.msra.mxu0 0
    %67 = vmatprep.subr.bf16.mxu0 0
    %68 = vmatpush1.bf16.msra.mxu0 0
    %69 = vmatprep.subr.bf16.mxu0 0
    %70 = vmatpush1.bf16.msra.mxu0 0
    %71 = vmatprep.subr.bf16.mxu0 0
    %72 = vmatpush1.bf16.msra.mxu0 0
    %73 = vmatprep.subr.bf16.mxu0 0
    %74 = vmatpush1.bf16.msra.mxu0 0
    %75 = vmatprep.subr.bf16.mxu0 0
    %76 = vmatpush1.bf16.msra.mxu0 0
    %77 = vmatprep.subr.bf16.mxu0 0
    %78 = vmatpush1.bf16.msra.mxu0 0
    %79 = vmatprep.subr.bf16.mxu0 0
    %80 = vmatpush1.bf16.msra.mxu0 0
    %81 = vmatprep.subr.bf16.mxu0 0
    %82 = vmatpush1.bf16.msra.mxu0 0
    %83 = vmatprep.subr.bf16.mxu0 0
    %84 = vmatpush1.bf16.msra.mxu0 0
    %85 = vmatprep.mubr.bf16.mxu0 0
    %86 = vmatmul.mubr.bf16.gmra.mrb[0].mxu0 %v51
    %v87 = vpop.f32.mrb[0].mxu0
    %v88 = vadd.f32 %v36, %v87
    %v89 = vpop.f32.mrb[0].mxu0
    %v90 = vpop.f32.mrb[0].mxu0
    %v91 = vadd.f32 %v36, %v90
    %v92 = vpop.f32.mrb[0].mxu0
    %93 = vdwg.mxu0
    %v94 = vpack.c.bf16 %v91, %v88
    %v96 = vunpack.c.l.b16 %v94
    %v97 = vunpack.c.h.b16 %v94
    %v98 = vpack.c.b16 %v96, %v96
    %v99 = vpack.c.b16 %v97, %v97
    %100 = vrot.lane.b32.xlu0 %v98, 96
    %v101 = vpop.permute.xlu0 %100
    %vm102 = vcmask 64512
    %v104 = vsel %vm102, %v98, 0
    %v107 = vsel %vm102, %v101, 0
    %109 = vmatprep.subr.bf16.mxu0 0
    %110 = vmatpush1.bf16.xpose.msra.mxu0 %v107
    %111 = vmatprep.subr.bf16.mxu0 0
    %112 = vmatpush1.bf16.xpose.msra.mxu0 0
    %113 = vmatprep.subr.bf16.mxu0 0
    %114 = vmatpush1.bf16.xpose.msra.mxu0 0
    %115 = vmatprep.subr.bf16.mxu0 0
    %116 = vmatpush1.bf16.xpose.msra.mxu0 0
    %117 = vmatprep.subr.bf16.mxu0 0
    %118 = vmatpush1.bf16.xpose.msra.mxu0 0
    %119 = vmatprep.subr.bf16.mxu0 0
    %120 = vmatpush1.bf16.xpose.msra.mxu0 0
    %121 = vmatprep.subr.bf16.mxu0 0
    %122 = vmatpush1.bf16.xpose.msra.mxu0 0
    %123 = vmatprep.subr.bf16.mxu0 0
    %124 = vmatpush1.bf16.xpose.msra.mxu0 0
    %125 = vmatprep.subr.bf16.mxu0 0
    %126 = vmatpush1.bf16.xpose.msra.mxu0 0
    %127 = vmatprep.subr.bf16.mxu0 0
    %128 = vmatpush1.bf16.xpose.msra.mxu0 0
    %129 = vmatprep.subr.bf16.mxu0 0
    %130 = vmatpush1.bf16.xpose.msra.mxu0 0
    %131 = vmatprep.subr.bf16.mxu0 0
    %132 = vmatpush1.bf16.xpose.msra.mxu0 0
    %133 = vmatprep.subr.bf16.mxu0 0
    %134 = vmatpush1.bf16.xpose.msra.mxu0 0
    %135 = vmatprep.subr.bf16.mxu0 0
    %136 = vmatpush1.bf16.xpose.msra.mxu0 0
    %137 = vmatprep.subr.bf16.mxu0 0
    %138 = vmatpush1.bf16.xpose.msra.mxu0 0
    %139 = vmatprep.subr.bf16.mxu0 0
    %140 = vmatpush1.bf16.xpose.msra.mxu0 0
    %141 = vmatprep.mubr.bf16.mxu0 0
    %142 = vmatmul.mubr.bf16.gmra.mrb[0].mxu0 %v104
    %v143 = vpop.f32.mrb[0].mxu0
    %v144 = vadd.f32 0.0, %v143
    %v145 = vpop.f32.mrb[0].mxu0
    %v146 = vpop.f32.mrb[0].mxu0
    %v147 = vpop.f32.mrb[0].mxu0
    %148 = vdwg.mxu0
    %149 = vrot.lane.b32.xlu0 %v99, 96
    %v150 = vpop.permute.xlu0 %149
    %v152 = vsel %vm102, %v99, 0
    %v155 = vsel %vm102, %v150, 0
    %157 = vmatprep.subr.bf16.mxu0 0
    %158 = vmatpush1.bf16.xpose.msra.mxu0 %v155
    %159 = vmatprep.subr.bf16.mxu0 0
    %160 = vmatpush1.bf16.xpose.msra.mxu0 0
    %161 = vmatprep.subr.bf16.mxu0 0
    %162 = vmatpush1.bf16.xpose.msra.mxu0 0
    %163 = vmatprep.subr.bf16.mxu0 0
    %164 = vmatpush1.bf16.xpose.msra.mxu0 0
    %165 = vmatprep.subr.bf16.mxu0 0
    %166 = vmatpush1.bf16.xpose.msra.mxu0 0
    %167 = vmatprep.subr.bf16.mxu0 0
    %168 = vmatpush1.bf16.xpose.msra.mxu0 0
    %169 = vmatprep.subr.bf16.mxu0 0
    %170 = vmatpush1.bf16.xpose.msra.mxu0 0
    %171 = vmatprep.subr.bf16.mxu0 0
    %172 = vmatpush1.bf16.xpose.msra.mxu0 0
    %173 = vmatprep.subr.bf16.mxu0 0
    %174 = vmatpush1.bf16.xpose.msra.mxu0 0
    %175 = vmatprep.subr.bf16.mxu0 0
    %176 = vmatpush1.bf16.xpose.msra.mxu0 0
    %177 = vmatprep.subr.bf16.mxu0 0
    %178 = vmatpush1.bf16.xpose.msra.mxu0 0
    %179 = vmatprep.subr.bf16.mxu0 0
    %180 = vmatpush1.bf16.xpose.msra.mxu0 0
    %181 = vmatprep.subr.bf16.mxu0 0
    %182 = vmatpush1.bf16.xpose.msra.mxu0 0
    %183 = vmatprep.subr.bf16.mxu0 0
    %184 = vmatpush1.bf16.xpose.msra.mxu0 0
    %185 = vmatprep.subr.bf16.mxu0 0
    %186 = vmatpush1.bf16.xpose.msra.mxu0 0
    %187 = vmatprep.subr.bf16.mxu0 0
    %188 = vmatpush1.bf16.xpose.msra.mxu0 0
    %189 = vmatprep.mubr.bf16.mxu0 0
    %190 = vmatmul.mubr.bf16.gmra.mrb[0].mxu0 %v152
    %v191 = vpop.f32.mrb[0].mxu0
    %v192 = vadd.f32 0.0, %v191
    %v193 = vpop.f32.mrb[0].mxu0
    %v194 = vpop.f32.mrb[0].mxu0
    %v195 = vpop.f32.mrb[0].mxu0
    %196 = vdwg.mxu0
    %v197 = vsel %vm102, %v144, -inf
    %198 = vmax.xlane.f32.xlu0 %v197
    %v199 = vpop.xlane.xlu0 %198
    %v200 = vsel %vm102, %v192, -inf
    %201 = vmax.xlane.f32.xlu0 %v200
    %v202 = vpop.xlane.xlu0 %201
    %v203 = vsub.f32 %v144, %v199
    %v204 = vsub.f32 %v192, %v202
    %v205 = vmul.f32 %v203, 1.442695
    %v206 = vpow.pop %v205
    %v207 = vmul.f32 %v204, 1.442695
    %v208 = vpow.pop %v207
    %v209 = vsel %vm102, %v206, 0.0
    %210 = vadd.xlane.f32.xlu0 %v209
    %v211 = vpop.xlane.xlu0 %210
    %v212 = vsel %vm102, %v208, 0.0
    %213 = vadd.xlane.f32.xlu0 %v212
    %v214 = vpop.xlane.xlu0 %213
    %v215 = vrcp.pop %v211
    %v216 = vrcp.pop %v214
    %v217 = vmul.f32 %v206, %v215
    %v218 = vmul.f32 %v208, %v216
    %v219 = vpack.c.bf16 %v217, %v217
    %v220 = vpack.c.bf16 %v218, %v218
    %221 = vrot.lane.b32.xlu0 %v98, 64
    %v222 = vpop.permute.xlu0 %221
    %v224 = vsel %vm102, %v219, 0
    %vm226 = vcmask 1043456
    %v228 = vsel %vm226, %v222, 0
    %230 = vmatprep.subr.bf16.mxu0 0
    %231 = vmatpush1.bf16.msra.mxu0 %v228
    %232 = vmatprep.subr.bf16.mxu0 0
    %233 = vmatpush1.bf16.msra.mxu0 0
    %234 = vmatprep.subr.bf16.mxu0 0
    %235 = vmatpush1.bf16.msra.mxu0 0
    %236 = vmatprep.subr.bf16.mxu0 0
    %237 = vmatpush1.bf16.msra.mxu0 0
    %238 = vmatprep.subr.bf16.mxu0 0
    %239 = vmatpush1.bf16.msra.mxu0 0
    %240 = vmatprep.subr.bf16.mxu0 0
    %241 = vmatpush1.bf16.msra.mxu0 0
    %242 = vmatprep.subr.bf16.mxu0 0
    %243 = vmatpush1.bf16.msra.mxu0 0
    %244 = vmatprep.subr.bf16.mxu0 0
    %245 = vmatpush1.bf16.msra.mxu0 0
    %246 = vmatprep.subr.bf16.mxu0 0
    %247 = vmatpush1.bf16.msra.mxu0 0
    %248 = vmatprep.subr.bf16.mxu0 0
    %249 = vmatpush1.bf16.msra.mxu0 0
    %250 = vmatprep.subr.bf16.mxu0 0
    %251 = vmatpush1.bf16.msra.mxu0 0
    %252 = vmatprep.subr.bf16.mxu0 0
    %253 = vmatpush1.bf16.msra.mxu0 0
    %254 = vmatprep.subr.bf16.mxu0 0
    %255 = vmatpush1.bf16.msra.mxu0 0
    %256 = vmatprep.subr.bf16.mxu0 0
    %257 = vmatpush1.bf16.msra.mxu0 0
    %258 = vmatprep.subr.bf16.mxu0 0
    %259 = vmatpush1.bf16.msra.mxu0 0
    %260 = vmatprep.subr.bf16.mxu0 0
    %261 = vmatpush1.bf16.msra.mxu0 0
    %262 = vmatprep.mubr.bf16.mxu0 0
    %263 = vmatmul.mubr.bf16.gmra.mrb[0].mxu0 %v224
    %v264 = vpop.f32.mrb[0].mxu0
    %v265 = vadd.f32 0.0, %v264
    %v266 = vpop.f32.mrb[0].mxu0
    %v267 = vpop.f32.mrb[0].mxu0
    %v268 = vpop.f32.mrb[0].mxu0
    %269 = vdwg.mxu0
    %270 = vrot.lane.b32.xlu0 %v99, 64
    %v271 = vpop.permute.xlu0 %270
    %v273 = vsel %vm102, %v220, 0
    %v276 = vsel %vm226, %v271, 0
    %278 = vmatprep.subr.bf16.mxu0 0
    %279 = vmatpush1.bf16.msra.mxu0 %v276
    %280 = vmatprep.subr.bf16.mxu0 0
    %281 = vmatpush1.bf16.msra.mxu0 0
    %282 = vmatprep.subr.bf16.mxu0 0
    %283 = vmatpush1.bf16.msra.mxu0 0
    %284 = vmatprep.subr.bf16.mxu0 0
    %285 = vmatpush1.bf16.msra.mxu0 0
    %286 = vmatprep.subr.bf16.mxu0 0
    %287 = vmatpush1.bf16.msra.mxu0 0
    %288 = vmatprep.subr.bf16.mxu0 0
    %289 = vmatpush1.bf16.msra.mxu0 0
    %290 = vmatprep.subr.bf16.mxu0 0
    %291 = vmatpush1.bf16.msra.mxu0 0
    %292 = vmatprep.subr.bf16.mxu0 0
    %293 = vmatpush1.bf16.msra.mxu0 0
    %294 = vmatprep.subr.bf16.mxu0 0
    %295 = vmatpush1.bf16.msra.mxu0 0
    %296 = vmatprep.subr.bf16.mxu0 0
    %297 = vmatpush1.bf16.msra.mxu0 0
    %298 = vmatprep.subr.bf16.mxu0 0
    %299 = vmatpush1.bf16.msra.mxu0 0
    %300 = vmatprep.subr.bf16.mxu0 0
    %301 = vmatpush1.bf16.msra.mxu0 0
    %302 = vmatprep.subr.bf16.mxu0 0
    %303 = vmatpush1.bf16.msra.mxu0 0
    %304 = vmatprep.subr.bf16.mxu0 0
    %305 = vmatpush1.bf16.msra.mxu0 0
    %306 = vmatprep.subr.bf16.mxu0 0
    %307 = vmatpush1.bf16.msra.mxu0 0
    %308 = vmatprep.subr.bf16.mxu0 0
    %309 = vmatpush1.bf16.msra.mxu0 0
    %310 = vmatprep.mubr.bf16.mxu0 0
    %311 = vmatmul.mubr.bf16.gmra.mrb[0].mxu0 %v273
    %v312 = vpop.f32.mrb[0].mxu0
    %v313 = vadd.f32 0.0, %v312
    %v314 = vpop.f32.mrb[0].mxu0
    %v315 = vpop.f32.mrb[0].mxu0
    %v316 = vpop.f32.mrb[0].mxu0
    %317 = vdwg.mxu0
    %v318 = vpack.c.bf16 %v313, %v265
    %319 = vst.msk [vmem:[#allocation2] sm:$0xff] %vm102, %v318
    %320 = vrot.lane.b32.xlu0 %v98, 120
    %v321 = vpop.permute.xlu0 %320
    %322 = vrot.lane.b32.xlu0 %v98, 88
    %v323 = vpop.permute.xlu0 %322
    %v325 = vsel %vm102, %v321, 0
    %v328 = vsel %vm102, %v323, 0
    %330 = vmatprep.subr.bf16.mxu0 0
    %331 = vmatpush1.bf16.xpose.msra.mxu0 %v328
    %332 = vmatprep.subr.bf16.mxu0 0
    %333 = vmatpush1.bf16.xpose.msra.mxu0 0
    %334 = vmatprep.subr.bf16.mxu0 0
    %335 = vmatpush1.bf16.xpose.msra.mxu0 0
    %336 = vmatprep.subr.bf16.mxu0 0
    %337 = vmatpush1.bf16.xpose.msra.mxu0 0
    %338 = vmatprep.subr.bf16.mxu0 0
    %339 = vmatpush1.bf16.xpose.msra.mxu0 0
    %340 = vmatprep.subr.bf16.mxu0 0
    %341 = vmatpush1.bf16.xpose.msra.mxu0 0
    %342 = vmatprep.subr.bf16.mxu0 0
    %343 = vmatpush1.bf16.xpose.msra.mxu0 0
    %344 = vmatprep.subr.bf16.mxu0 0
    %345 = vmatpush1.bf16.xpose.msra.mxu0 0
    %346 = vmatprep.subr.bf16.mxu0 0
    %347 = vmatpush1.bf16.xpose.msra.mxu0 0
    %348 = vmatprep.subr.bf16.mxu0 0
    %349 = vmatpush1.bf16.xpose.msra.mxu0 0
    %350 = vmatprep.subr.bf16.mxu0 0
    %351 = vmatpush1.bf16.xpose.msra.mxu0 0
    %352 = vmatprep.subr.bf16.mxu0 0
    %353 = vmatpush1.bf16.xpose.msra.mxu0 0
    %354 = vmatprep.subr.bf16.mxu0 0
    %355 = vmatpush1.bf16.xpose.msra.mxu0 0
    %356 = vmatprep.subr.bf16.mxu0 0
    %357 = vmatpush1.bf16.xpose.msra.mxu0 0
    %358 = vmatprep.subr.bf16.mxu0 0
    %359 = vmatpush1.bf16.xpose.msra.mxu0 0
    %360 = vmatprep.subr.bf16.mxu0 0
    %361 = vmatpush1.bf16.xpose.msra.mxu0 0
    %362 = vmatprep.mubr.bf16.mxu0 0
    %363 = vmatmul.mubr.bf16.gmra.mrb[0].mxu0 %v325
    %v364 = vpop.f32.mrb[0].mxu0
    %v365 = vadd.f32 0.0, %v364
    %v366 = vpop.f32.mrb[0].mxu0
    %v367 = vpop.f32.mrb[0].mxu0
    %v368 = vpop.f32.mrb[0].mxu0
    %369 = vdwg.mxu0
    %370 = vrot.lane.b32.xlu0 %v99, 120
    %v371 = vpop.permute.xlu0 %370
    %372 = vrot.lane.b32.xlu0 %v99, 88
    %v373 = vpop.permute.xlu0 %372
    %v375 = vsel %vm102, %v371, 0
    %v378 = vsel %vm102, %v373, 0
    %380 = vmatprep.subr.bf16.mxu0 0
    %381 = vmatpush1.bf16.xpose.msra.mxu0 %v378
    %382 = vmatprep.subr.bf16.mxu0 0
    %383 = vmatpush1.bf16.xpose.msra.mxu0 0
    %384 = vmatprep.subr.bf16.mxu0 0
    %385 = vmatpush1.bf16.xpose.msra.mxu0 0
    %386 = vmatprep.subr.bf16.mxu0 0
    %387 = vmatpush1.bf16.xpose.msra.mxu0 0
    %388 = vmatprep.subr.bf16.mxu0 0
    %389 = vmatpush1.bf16.xpose.msra.mxu0 0
    %390 = vmatprep.subr.bf16.mxu0 0
    %391 = vmatpush1.bf16.xpose.msra.mxu0 0
    %392 = vmatprep.subr.bf16.mxu0 0
    %393 = vmatpush1.bf16.xpose.msra.mxu0 0
    %394 = vmatprep.subr.bf16.mxu0 0
    %395 = vmatpush1.bf16.xpose.msra.mxu0 0
    %396 = vmatprep.subr.bf16.mxu0 0
    %397 = vmatpush1.bf16.xpose.msra.mxu0 0
    %398 = vmatprep.subr.bf16.mxu0 0
    %399 = vmatpush1.bf16.xpose.msra.mxu0 0
    %400 = vmatprep.subr.bf16.mxu0 0
    %401 = vmatpush1.bf16.xpose.msra.mxu0 0
    %402 = vmatprep.subr.bf16.mxu0 0
    %403 = vmatpush1.bf16.xpose.msra.mxu0 0
    %404 = vmatprep.subr.bf16.mxu0 0
    %405 = vmatpush1.bf16.xpose.msra.mxu0 0
    %406 = vmatprep.subr.bf16.mxu0 0
    %407 = vmatpush1.bf16.xpose.msra.mxu0 0
    %408 = vmatprep.subr.bf16.mxu0 0
    %409 = vmatpush1.bf16.xpose.msra.mxu0 0
    %410 = vmatprep.subr.bf16.mxu0 0
    %411 = vmatpush1.bf16.xpose.msra.mxu0 0
    %412 = vmatprep.mubr.bf16.mxu0 0
    %413 = vmatmul.mubr.bf16.gmra.mrb[0].mxu0 %v375
    %v414 = vpop.f32.mrb[0].mxu0
    %v415 = vadd.f32 0.0, %v414
    %v416 = vpop.f32.mrb[0].mxu0
    %v417 = vpop.f32.mrb[0].mxu0
    %v418 = vpop.f32.mrb[0].mxu0
    %419 = vdwg.mxu0
    %v420 = vsel %vm102, %v365, -inf
    %421 = vmax.xlane.f32.xlu0 %v420
    %v422 = vpop.xlane.xlu0 %421
    %v423 = vsel %vm102, %v415, -inf
    %424 = vmax.xlane.f32.xlu0 %v423
    %v425 = vpop.xlane.xlu0 %424
    %v426 = vsub.f32 %v365, %v422
    %v427 = vsub.f32 %v415, %v425
    %v428 = vmul.f32 %v426, 1.442695
    %v429 = vpow.pop %v428
    %v430 = vmul.f32 %v427, 1.442695
    %v431 = vpow.pop %v430
    %v432 = vsel %vm102, %v429, 0.0
    %433 = vadd.xlane.f32.xlu0 %v432
    %v434 = vpop.xlane.xlu0 %433
    %v435 = vsel %vm102, %v431, 0.0
    %436 = vadd.xlane.f32.xlu0 %v435
    %v437 = vpop.xlane.xlu0 %436
    %v438 = vrcp.pop %v434
    %v439 = vrcp.pop %v437
    %v440 = vmul.f32 %v429, %v438
    %v441 = vmul.f32 %v431, %v439
    %v442 = vpack.c.bf16 %v440, %v440
    %v443 = vpack.c.bf16 %v441, %v441
    %444 = vrot.lane.b32.xlu0 %v98, 56
    %v445 = vpop.permute.xlu0 %444
    %v447 = vsel %vm102, %v442, 0
    %v450 = vsel %vm226, %v445, 0
    %452 = vmatprep.subr.bf16.mxu0 0
    %453 = vmatpush1.bf16.msra.mxu0 %v450
    %454 = vmatprep.subr.bf16.mxu0 0
    %455 = vmatpush1.bf16.msra.mxu0 0
    %456 = vmatprep.subr.bf16.mxu0 0
    %457 = vmatpush1.bf16.msra.mxu0 0
    %458 = vmatprep.subr.bf16.mxu0 0
    %459 = vmatpush1.bf16.msra.mxu0 0
    %460 = vmatprep.subr.bf16.mxu0 0
    %461 = vmatpush1.bf16.msra.mxu0 0
    %462 = vmatprep.subr.bf16.mxu0 0
    %463 = vmatpush1.bf16.msra.mxu0 0
    %464 = vmatprep.subr.bf16.mxu0 0
    %465 = vmatpush1.bf16.msra.mxu0 0
    %466 = vmatprep.subr.bf16.mxu0 0
    %467 = vmatpush1.bf16.msra.mxu0 0
    %468 = vmatprep.subr.bf16.mxu0 0
    %469 = vmatpush1.bf16.msra.mxu0 0
    %470 = vmatprep.subr.bf16.mxu0 0
    %471 = vmatpush1.bf16.msra.mxu0 0
    %472 = vmatprep.subr.bf16.mxu0 0
    %473 = vmatpush1.bf16.msra.mxu0 0
    %474 = vmatprep.subr.bf16.mxu0 0
    %475 = vmatpush1.bf16.msra.mxu0 0
    %476 = vmatprep.subr.bf16.mxu0 0
    %477 = vmatpush1.bf16.msra.mxu0 0
    %478 = vmatprep.subr.bf16.mxu0 0
    %479 = vmatpush1.bf16.msra.mxu0 0
    %480 = vmatprep.subr.bf16.mxu0 0
    %481 = vmatpush1.bf16.msra.mxu0 0
    %482 = vmatprep.subr.bf16.mxu0 0
    %483 = vmatpush1.bf16.msra.mxu0 0
    %484 = vmatprep.mubr.bf16.mxu0 0
    %485 = vmatmul.mubr.bf16.gmra.mrb[0].mxu0 %v447
    %v486 = vpop.f32.mrb[0].mxu0
    %v487 = vadd.f32 0.0, %v486
    %v488 = vpop.f32.mrb[0].mxu0
    %v489 = vpop.f32.mrb[0].mxu0
    %v490 = vpop.f32.mrb[0].mxu0
    %491 = vdwg.mxu0
    %492 = vrot.lane.b32.xlu0 %v99, 56
    %v493 = vpop.permute.xlu0 %492
    %v495 = vsel %vm102, %v443, 0
    %v498 = vsel %vm226, %v493, 0
    %500 = vmatprep.subr.bf16.mxu0 0
    %501 = vmatpush1.bf16.msra.mxu0 %v498
    %502 = vmatprep.subr.bf16.mxu0 0
    %503 = vmatpush1.bf16.msra.mxu0 0
    %504 = vmatprep.subr.bf16.mxu0 0
    %505 = vmatpush1.bf16.msra.mxu0 0
    %506 = vmatprep.subr.bf16.mxu0 0
    %507 = vmatpush1.bf16.msra.mxu0 0
    %508 = vmatprep.subr.bf16.mxu0 0
    %509 = vmatpush1.bf16.msra.mxu0 0
    %510 = vmatprep.subr.bf16.mxu0 0
    %511 = vmatpush1.bf16.msra.mxu0 0
    %512 = vmatprep.subr.bf16.mxu0 0
    %513 = vmatpush1.bf16.msra.mxu0 0
    %514 = vmatprep.subr.bf16.mxu0 0
    %515 = vmatpush1.bf16.msra.mxu0 0
    %516 = vmatprep.subr.bf16.mxu0 0
    %517 = vmatpush1.bf16.msra.mxu0 0
    %518 = vmatprep.subr.bf16.mxu0 0
    %519 = vmatpush1.bf16.msra.mxu0 0
    %520 = vmatprep.subr.bf16.mxu0 0
    %521 = vmatpush1.bf16.msra.mxu0 0
    %522 = vmatprep.subr.bf16.mxu0 0
    %523 = vmatpush1.bf16.msra.mxu0 0
    %524 = vmatprep.subr.bf16.mxu0 0
    %525 = vmatpush1.bf16.msra.mxu0 0
    %526 = vmatprep.subr.bf16.mxu0 0
    %527 = vmatpush1.bf16.msra.mxu0 0
    %528 = vmatprep.subr.bf16.mxu0 0
    %529 = vmatpush1.bf16.msra.mxu0 0
    %530 = vmatprep.subr.bf16.mxu0 0
    %531 = vmatpush1.bf16.msra.mxu0 0
    %532 = vmatprep.mubr.bf16.mxu0 0
    %533 = vmatmul.mubr.bf16.gmra.mrb[0].mxu0 %v495
    %v534 = vpop.f32.mrb[0].mxu0
    %v535 = vadd.f32 0.0, %v534
    %v536 = vpop.f32.mrb[0].mxu0
    %v537 = vpop.f32.mrb[0].mxu0
    %v538 = vpop.f32.mrb[0].mxu0
    %539 = vdwg.mxu0
    %v540 = vpack.c.bf16 %v535, %v487
    %542 = vrot.lane.b32.xlu0 %v540, 8
    %v543 = vpop.permute.xlu0 %542
    %vm545 = vcmask 130112
    %546 = vst.msk [vmem:[#allocation2] sm:$0xff] %vm545, %v543
    %547 = vrot.lane.b32.xlu0 %v98, 112
    %v548 = vpop.permute.xlu0 %547
    %549 = vrot.lane.b32.xlu0 %v98, 80
    %v550 = vpop.permute.xlu0 %549
    %v552 = vsel %vm102, %v548, 0
    %v555 = vsel %vm102, %v550, 0
    %557 = vmatprep.subr.bf16.mxu0 0
    %558 = vmatpush1.bf16.xpose.msra.mxu0 %v555
    %559 = vmatprep.subr.bf16.mxu0 0
    %560 = vmatpush1.bf16.xpose.msra.mxu0 0
    %561 = vmatprep.subr.bf16.mxu0 0
    %562 = vmatpush1.bf16.xpose.msra.mxu0 0
    %563 = vmatprep.subr.bf16.mxu0 0
    %564 = vmatpush1.bf16.xpose.msra.mxu0 0
    %565 = vmatprep.subr.bf16.mxu0 0
    %566 = vmatpush1.bf16.xpose.msra.mxu0 0
    %567 = vmatprep.subr.bf16.mxu0 0
    %568 = vmatpush1.bf16.xpose.msra.mxu0 0
    %569 = vmatprep.subr.bf16.mxu0 0
    %570 = vmatpush1.bf16.xpose.msra.mxu0 0
    %571 = vmatprep.subr.bf16.mxu0 0
    %572 = vmatpush1.bf16.xpose.msra.mxu0 0
    %573 = vmatprep.subr.bf16.mxu0 0
    %574 = vmatpush1.bf16.xpose.msra.mxu0 0
    %575 = vmatprep.subr.bf16.mxu0 0
    %576 = vmatpush1.bf16.xpose.msra.mxu0 0
    %577 = vmatprep.subr.bf16.mxu0 0
    %578 = vmatpush1.bf16.xpose.msra.mxu0 0
    %579 = vmatprep.subr.bf16.mxu0 0
    %580 = vmatpush1.bf16.xpose.msra.mxu0 0
    %581 = vmatprep.subr.bf16.mxu0 0
    %582 = vmatpush1.bf16.xpose.msra.mxu0 0
    %583 = vmatprep.subr.bf16.mxu0 0
    %584 = vmatpush1.bf16.xpose.msra.mxu0 0
    %585 = vmatprep.subr.bf16.mxu0 0
    %586 = vmatpush1.bf16.xpose.msra.mxu0 0
    %587 = vmatprep.subr.bf16.mxu0 0
    %588 = vmatpush1.bf16.xpose.msra.mxu0 0
    %589 = vmatprep.mubr.bf16.mxu0 0
    %590 = vmatmul.mubr.bf16.gmra.mrb[0].mxu0 %v552
    %v591 = vpop.f32.mrb[0].mxu0
    %v592 = vadd.f32 0.0, %v591
    %v593 = vpop.f32.mrb[0].mxu0
    %v594 = vpop.f32.mrb[0].mxu0
    %v595 = vpop.f32.mrb[0].mxu0
    %596 = vdwg.mxu0
    %597 = vrot.lane.b32.xlu0 %v99, 112
    %v598 = vpop.permute.xlu0 %597
    %599 = vrot.lane.b32.xlu0 %v99, 80
    %v600 = vpop.permute.xlu0 %599
    %v602 = vsel %vm102, %v598, 0
    %v605 = vsel %vm102, %v600, 0
    %607 = vmatprep.subr.bf16.mxu0 0
    %608 = vmatpush1.bf16.xpose.msra.mxu0 %v605
    %609 = vmatprep.subr.bf16.mxu0 0
    %610 = vmatpush1.bf16.xpose.msra.mxu0 0
    %611 = vmatprep.subr.bf16.mxu0 0
    %612 = vmatpush1.bf16.xpose.msra.mxu0 0
    %613 = vmatprep.subr.bf16.mxu0 0
    %614 = vmatpush1.bf16.xpose.msra.mxu0 0
    %615 = vmatprep.subr.bf16.mxu0 0
    %616 = vmatpush1.bf16.xpose.msra.mxu0 0
    %617 = vmatprep.subr.bf16.mxu0 0
    %618 = vmatpush1.bf16.xpose.msra.mxu0 0
    %619 = vmatprep.subr.bf16.mxu0 0
    %620 = vmatpush1.bf16.xpose.msra.mxu0 0
    %621 = vmatprep.subr.bf16.mxu0 0
    %622 = vmatpush1.bf16.xpose.msra.mxu0 0
    %623 = vmatprep.subr.bf16.mxu0 0
    %624 = vmatpush1.bf16.xpose.msra.mxu0 0
    %625 = vmatprep.subr.bf16.mxu0 0
    %626 = vmatpush1.bf16.xpose.msra.mxu0 0
    %627 = vmatprep.subr.bf16.mxu0 0
    %628 = vmatpush1.bf16.xpose.msra.mxu0 0
    %629 = vmatprep.subr.bf16.mxu0 0
    %630 = vmatpush1.bf16.xpose.msra.mxu0 0
    %631 = vmatprep.subr.bf16.mxu0 0
    %632 = vmatpush1.bf16.xpose.msra.mxu0 0
    %633 = vmatprep.subr.bf16.mxu0 0
    %634 = vmatpush1.bf16.xpose.msra.mxu0 0
    %635 = vmatprep.subr.bf16.mxu0 0
    %636 = vmatpush1.bf16.xpose.msra.mxu0 0
    %637 = vmatprep.subr.bf16.mxu0 0
    %638 = vmatpush1.bf16.xpose.msra.mxu0 0
    %639 = vmatprep.mubr.bf16.mxu0 0
    %640 = vmatmul.mubr.bf16.gmra.mrb[0].mxu0 %v602
    %v641 = vpop.f32.mrb[0].mxu0
    %v642 = vadd.f32 0.0, %v641
    %v643 = vpop.f32.mrb[0].mxu0
    %v644 = vpop.f32.mrb[0].mxu0
    %v645 = vpop.f32.mrb[0].mxu0
    %646 = vdwg.mxu0
    %v647 = vsel %vm102, %v592, -inf
    %648 = vmax.xlane.f32.xlu0 %v647
    %v649 = vpop.xlane.xlu0 %648
    %v650 = vsel %vm102, %v642, -inf
    %651 = vmax.xlane.f32.xlu0 %v650
    %v652 = vpop.xlane.xlu0 %651
    %v653 = vsub.f32 %v592, %v649
    %v654 = vsub.f32 %v642, %v652
    %v655 = vmul.f32 %v653, 1.442695
    %v656 = vpow.pop %v655
    %v657 = vmul.f32 %v654, 1.442695
    %v658 = vpow.pop %v657
    %v659 = vsel %vm102, %v656, 0.0
    %660 = vadd.xlane.f32.xlu0 %v659
    %v661 = vpop.xlane.xlu0 %660
    %v662 = vsel %vm102, %v658, 0.0
    %663 = vadd.xlane.f32.xlu0 %v662
    %v664 = vpop.xlane.xlu0 %663
    %v665 = vrcp.pop %v661
    %v666 = vrcp.pop %v664
    %v667 = vmul.f32 %v656, %v665
    %v668 = vmul.f32 %v658, %v666
    %v669 = vpack.c.bf16 %v667, %v667
    %v670 = vpack.c.bf16 %v668, %v668
    %671 = vrot.lane.b32.xlu0 %v98, 48
    %v672 = vpop.permute.xlu0 %671
    %v674 = vsel %vm102, %v669, 0
    %v677 = vsel %vm226, %v672, 0
    %679 = vmatprep.subr.bf16.mxu0 0
    %680 = vmatpush1.bf16.msra.mxu0 %v677
    %681 = vmatprep.subr.bf16.mxu0 0
    %682 = vmatpush1.bf16.msra.mxu0 0
    %683 = vmatprep.subr.bf16.mxu0 0
    %684 = vmatpush1.bf16.msra.mxu0 0
    %685 = vmatprep.subr.bf16.mxu0 0
    %686 = vmatpush1.bf16.msra.mxu0 0
    %687 = vmatprep.subr.bf16.mxu0 0
    %688 = vmatpush1.bf16.msra.mxu0 0
    %689 = vmatprep.subr.bf16.mxu0 0
    %690 = vmatpush1.bf16.msra.mxu0 0
    %691 = vmatprep.subr.bf16.mxu0 0
    %692 = vmatpush1.bf16.msra.mxu0 0
    %693 = vmatprep.subr.bf16.mxu0 0
    %694 = vmatpush1.bf16.msra.mxu0 0
    %695 = vmatprep.subr.bf16.mxu0 0
    %696 = vmatpush1.bf16.msra.mxu0 0
    %697 = vmatprep.subr.bf16.mxu0 0
    %698 = vmatpush1.bf16.msra.mxu0 0
    %699 = vmatprep.subr.bf16.mxu0 0
    %700 = vmatpush1.bf16.msra.mxu0 0
    %701 = vmatprep.subr.bf16.mxu0 0
    %702 = vmatpush1.bf16.msra.mxu0 0
    %703 = vmatprep.subr.bf16.mxu0 0
    %704 = vmatpush1.bf16.msra.mxu0 0
    %705 = vmatprep.subr.bf16.mxu0 0
    %706 = vmatpush1.bf16.msra.mxu0 0
    %707 = vmatprep.subr.bf16.mxu0 0
    %708 = vmatpush1.bf16.msra.mxu0 0
    %709 = vmatprep.subr.bf16.mxu0 0
    %710 = vmatpush1.bf16.msra.mxu0 0
    %711 = vmatprep.mubr.bf16.mxu0 0
    %712 = vmatmul.mubr.bf16.gmra.mrb[0].mxu0 %v674
    %v713 = vpop.f32.mrb[0].mxu0
    %v714 = vadd.f32 0.0, %v713
    %v715 = vpop.f32.mrb[0].mxu0
    %v716 = vpop.f32.mrb[0].mxu0
    %v717 = vpop.f32.mrb[0].mxu0
    %718 = vdwg.mxu0
    %719 = vrot.lane.b32.xlu0 %v99, 48
    %v720 = vpop.permute.xlu0 %719
    %v722 = vsel %vm102, %v670, 0
    %v725 = vsel %vm226, %v720, 0
    %727 = vmatprep.subr.bf16.mxu0 0
    %728 = vmatpush1.bf16.msra.mxu0 %v725
    %729 = vmatprep.subr.bf16.mxu0 0
    %730 = vmatpush1.bf16.msra.mxu0 0
    %731 = vmatprep.subr.bf16.mxu0 0
    %732 = vmatpush1.bf16.msra.mxu0 0
    %733 = vmatprep.subr.bf16.mxu0 0
    %734 = vmatpush1.bf16.msra.mxu0 0
    %735 = vmatprep.subr.bf16.mxu0 0
    %736 = vmatpush1.bf16.msra.mxu0 0
    %737 = vmatprep.subr.bf16.mxu0 0
    %738 = vmatpush1.bf16.msra.mxu0 0
    %739 = vmatprep.subr.bf16.mxu0 0
    %740 = vmatpush1.bf16.msra.mxu0 0
    %741 = vmatprep.subr.bf16.mxu0 0
    %742 = vmatpush1.bf16.msra.mxu0 0
    %743 = vmatprep.subr.bf16.mxu0 0
    %744 = vmatpush1.bf16.msra.mxu0 0
    %745 = vmatprep.subr.bf16.mxu0 0
    %746 = vmatpush1.bf16.msra.mxu0 0
    %747 = vmatprep.subr.bf16.mxu0 0
    %748 = vmatpush1.bf16.msra.mxu0 0
    %749 = vmatprep.subr.bf16.mxu0 0
    %750 = vmatpush1.bf16.msra.mxu0 0
    %751 = vmatprep.subr.bf16.mxu0 0
    %752 = vmatpush1.bf16.msra.mxu0 0
    %753 = vmatprep.subr.bf16.mxu0 0
    %754 = vmatpush1.bf16.msra.mxu0 0
    %755 = vmatprep.subr.bf16.mxu0 0
    %756 = vmatpush1.bf16.msra.mxu0 0
    %757 = vmatprep.subr.bf16.mxu0 0
    %758 = vmatpush1.bf16.msra.mxu0 0
    %759 = vmatprep.mubr.bf16.mxu0 0
    %760 = vmatmul.mubr.bf16.gmra.mrb[0].mxu0 %v722
    %v761 = vpop.f32.mrb[0].mxu0
    %v762 = vadd.f32 0.0, %v761
    %v763 = vpop.f32.mrb[0].mxu0
    %v764 = vpop.f32.mrb[0].mxu0
    %v765 = vpop.f32.mrb[0].mxu0
    %766 = vdwg.mxu0
    %v767 = vpack.c.bf16 %v762, %v714
    %769 = vrot.lane.b32.xlu0 %v767, 16
    %v770 = vpop.permute.xlu0 %769
    %vm772 = vcmask 195712
    %773 = vst.msk [vmem:[#allocation2] sm:$0xff] %vm772, %v770
    %774 = vrot.lane.b32.xlu0 %v98, 104
    %v775 = vpop.permute.xlu0 %774
    %776 = vrot.lane.b32.xlu0 %v98, 72
    %v777 = vpop.permute.xlu0 %776
    %v779 = vsel %vm102, %v775, 0
    %v782 = vsel %vm102, %v777, 0
    %784 = vmatprep.subr.bf16.mxu0 0
    %785 = vmatpush1.bf16.xpose.msra.mxu0 %v782
    %786 = vmatprep.subr.bf16.mxu0 0
    %787 = vmatpush1.bf16.xpose.msra.mxu0 0
    %788 = vmatprep.subr.bf16.mxu0 0
    %789 = vmatpush1.bf16.xpose.msra.mxu0 0
    %790 = vmatprep.subr.bf16.mxu0 0
    %791 = vmatpush1.bf16.xpose.msra.mxu0 0
    %792 = vmatprep.subr.bf16.mxu0 0
    %793 = vmatpush1.bf16.xpose.msra.mxu0 0
    %794 = vmatprep.subr.bf16.mxu0 0
    %795 = vmatpush1.bf16.xpose.msra.mxu0 0
    %796 = vmatprep.subr.bf16.mxu0 0
    %797 = vmatpush1.bf16.xpose.msra.mxu0 0
    %798 = vmatprep.subr.bf16.mxu0 0
    %799 = vmatpush1.bf16.xpose.msra.mxu0 0
    %800 = vmatprep.subr.bf16.mxu0 0
    %801 = vmatpush1.bf16.xpose.msra.mxu0 0
    %802 = vmatprep.subr.bf16.mxu0 0
    %803 = vmatpush1.bf16.xpose.msra.mxu0 0
    %804 = vmatprep.subr.bf16.mxu0 0
    %805 = vmatpush1.bf16.xpose.msra.mxu0 0
    %806 = vmatprep.subr.bf16.mxu0 0
    %807 = vmatpush1.bf16.xpose.msra.mxu0 0
    %808 = vmatprep.subr.bf16.mxu0 0
    %809 = vmatpush1.bf16.xpose.msra.mxu0 0
    %810 = vmatprep.subr.bf16.mxu0 0
    %811 = vmatpush1.bf16.xpose.msra.mxu0 0
    %812 = vmatprep.subr.bf16.mxu0 0
    %813 = vmatpush1.bf16.xpose.msra.mxu0 0
    %814 = vmatprep.subr.bf16.mxu0 0
    %815 = vmatpush1.bf16.xpose.msra.mxu0 0
    %816 = vmatprep.mubr.bf16.mxu0 0
    %817 = vmatmul.mubr.bf16.gmra.mrb[0].mxu0 %v779
    %v818 = vpop.f32.mrb[0].mxu0
    %v819 = vadd.f32 0.0, %v818
    %v820 = vpop.f32.mrb[0].mxu0
    %v821 = vpop.f32.mrb[0].mxu0
    %v822 = vpop.f32.mrb[0].mxu0
    %823 = vdwg.mxu0
    %824 = vrot.lane.b32.xlu0 %v99, 104
    %v825 = vpop.permute.xlu0 %824
    %826 = vrot.lane.b32.xlu0 %v99, 72
    %v827 = vpop.permute.xlu0 %826
    %v829 = vsel %vm102, %v825, 0
    %v832 = vsel %vm102, %v827, 0
    %834 = vmatprep.subr.bf16.mxu0 0
    %835 = vmatpush1.bf16.xpose.msra.mxu0 %v832
    %836 = vmatprep.subr.bf16.mxu0 0
    %837 = vmatpush1.bf16.xpose.msra.mxu0 0
    %838 = vmatprep.subr.bf16.mxu0 0
    %839 = vmatpush1.bf16.xpose.msra.mxu0 0
    %840 = vmatprep.subr.bf16.mxu0 0
    %841 = vmatpush1.bf16.xpose.msra.mxu0 0
    %842 = vmatprep.subr.bf16.mxu0 0
    %843 = vmatpush1.bf16.xpose.msra.mxu0 0
    %844 = vmatprep.subr.bf16.mxu0 0
    %845 = vmatpush1.bf16.xpose.msra.mxu0 0
    %846 = vmatprep.subr.bf16.mxu0 0
    %847 = vmatpush1.bf16.xpose.msra.mxu0 0
    %848 = vmatprep.subr.bf16.mxu0 0
    %849 = vmatpush1.bf16.xpose.msra.mxu0 0
    %850 = vmatprep.subr.bf16.mxu0 0
    %851 = vmatpush1.bf16.xpose.msra.mxu0 0
    %852 = vmatprep.subr.bf16.mxu0 0
    %853 = vmatpush1.bf16.xpose.msra.mxu0 0
    %854 = vmatprep.subr.bf16.mxu0 0
    %855 = vmatpush1.bf16.xpose.msra.mxu0 0
    %856 = vmatprep.subr.bf16.mxu0 0
    %857 = vmatpush1.bf16.xpose.msra.mxu0 0
    %858 = vmatprep.subr.bf16.mxu0 0
    %859 = vmatpush1.bf16.xpose.msra.mxu0 0
    %860 = vmatprep.subr.bf16.mxu0 0
    %861 = vmatpush1.bf16.xpose.msra.mxu0 0
    %862 = vmatprep.subr.bf16.mxu0 0
    %863 = vmatpush1.bf16.xpose.msra.mxu0 0
    %864 = vmatprep.subr.bf16.mxu0 0
    %865 = vmatpush1.bf16.xpose.msra.mxu0 0
    %866 = vmatprep.mubr.bf16.mxu0 0
    %867 = vmatmul.mubr.bf16.gmra.mrb[0].mxu0 %v829
    %v868 = vpop.f32.mrb[0].mxu0
    %v869 = vadd.f32 0.0, %v868
    %v870 = vpop.f32.mrb[0].mxu0
    %v871 = vpop.f32.mrb[0].mxu0
    %v872 = vpop.f32.mrb[0].mxu0
    %873 = vdwg.mxu0
    %v874 = vsel %vm102, %v819, -inf
    %875 = vmax.xlane.f32.xlu0 %v874
    %v876 = vpop.xlane.xlu0 %875
    %v877 = vsel %vm102, %v869, -inf
    %878 = vmax.xlane.f32.xlu0 %v877
    %v879 = vpop.xlane.xlu0 %878
    %v880 = vsub.f32 %v819, %v876
    %v881 = vsub.f32 %v869, %v879
    %v882 = vmul.f32 %v880, 1.442695
    %v883 = vpow.pop %v882
    %v884 = vmul.f32 %v881, 1.442695
    %v885 = vpow.pop %v884
    %v886 = vsel %vm102, %v883, 0.0
    %887 = vadd.xlane.f32.xlu0 %v886
    %v888 = vpop.xlane.xlu0 %887
    %v889 = vsel %vm102, %v885, 0.0
    %890 = vadd.xlane.f32.xlu0 %v889
    %v891 = vpop.xlane.xlu0 %890
    %v892 = vrcp.pop %v888
    %v893 = vrcp.pop %v891
    %v894 = vmul.f32 %v883, %v892
    %v895 = vmul.f32 %v885, %v893
    %v896 = vpack.c.bf16 %v894, %v894
    %v897 = vpack.c.bf16 %v895, %v895
    %898 = vrot.lane.b32.xlu0 %v98, 40
    %v899 = vpop.permute.xlu0 %898
    %v901 = vsel %vm102, %v896, 0
    %v904 = vsel %vm226, %v899, 0
    %906 = vmatprep.subr.bf16.mxu0 0
    %907 = vmatpush1.bf16.msra.mxu0 %v904
    %908 = vmatprep.subr.bf16.mxu0 0
    %909 = vmatpush1.bf16.msra.mxu0 0
    %910 = vmatprep.subr.bf16.mxu0 0
    %911 = vmatpush1.bf16.msra.mxu0 0
    %912 = vmatprep.subr.bf16.mxu0 0
    %913 = vmatpush1.bf16.msra.mxu0 0
    %914 = vmatprep.subr.bf16.mxu0 0
    %915 = vmatpush1.bf16.msra.mxu0 0
    %916 = vmatprep.subr.bf16.mxu0 0
    %917 = vmatpush1.bf16.msra.mxu0 0
    %918 = vmatprep.subr.bf16.mxu0 0
    %919 = vmatpush1.bf16.msra.mxu0 0
    %920 = vmatprep.subr.bf16.mxu0 0
    %921 = vmatpush1.bf16.msra.mxu0 0
    %922 = vmatprep.subr.bf16.mxu0 0
    %923 = vmatpush1.bf16.msra.mxu0 0
    %924 = vmatprep.subr.bf16.mxu0 0
    %925 = vmatpush1.bf16.msra.mxu0 0
    %926 = vmatprep.subr.bf16.mxu0 0
    %927 = vmatpush1.bf16.msra.mxu0 0
    %928 = vmatprep.subr.bf16.mxu0 0
    %929 = vmatpush1.bf16.msra.mxu0 0
    %930 = vmatprep.subr.bf16.mxu0 0
    %931 = vmatpush1.bf16.msra.mxu0 0
    %932 = vmatprep.subr.bf16.mxu0 0
    %933 = vmatpush1.bf16.msra.mxu0 0
    %934 = vmatprep.subr.bf16.mxu0 0
    %935 = vmatpush1.bf16.msra.mxu0 0
    %936 = vmatprep.subr.bf16.mxu0 0
    %937 = vmatpush1.bf16.msra.mxu0 0
    %938 = vmatprep.mubr.bf16.mxu0 0
    %939 = vmatmul.mubr.bf16.gmra.mrb[0].mxu0 %v901
    %v940 = vpop.f32.mrb[0].mxu0
    %v941 = vadd.f32 0.0, %v940
    %v942 = vpop.f32.mrb[0].mxu0
    %v943 = vpop.f32.mrb[0].mxu0
    %v944 = vpop.f32.mrb[0].mxu0
    %945 = vdwg.mxu0
    %946 = vrot.lane.b32.xlu0 %v99, 40
    %v947 = vpop.permute.xlu0 %946
    %v949 = vsel %vm102, %v897, 0
    %v952 = vsel %vm226, %v947, 0
    %954 = vmatprep.subr.bf16.mxu0 0
    %955 = vmatpush1.bf16.msra.mxu0 %v952
    %956 = vmatprep.subr.bf16.mxu0 0
    %957 = vmatpush1.bf16.msra.mxu0 0
    %958 = vmatprep.subr.bf16.mxu0 0
    %959 = vmatpush1.bf16.msra.mxu0 0
    %960 = vmatprep.subr.bf16.mxu0 0
    %961 = vmatpush1.bf16.msra.mxu0 0
    %962 = vmatprep.subr.bf16.mxu0 0
    %963 = vmatpush1.bf16.msra.mxu0 0
    %964 = vmatprep.subr.bf16.mxu0 0
    %965 = vmatpush1.bf16.msra.mxu0 0
    %966 = vmatprep.subr.bf16.mxu0 0
    %967 = vmatpush1.bf16.msra.mxu0 0
    %968 = vmatprep.subr.bf16.mxu0 0
    %969 = vmatpush1.bf16.msra.mxu0 0
    %970 = vmatprep.subr.bf16.mxu0 0
    %971 = vmatpush1.bf16.msra.mxu0 0
    %972 = vmatprep.subr.bf16.mxu0 0
    %973 = vmatpush1.bf16.msra.mxu0 0
    %974 = vmatprep.subr.bf16.mxu0 0
    %975 = vmatpush1.bf16.msra.mxu0 0
    %976 = vmatprep.subr.bf16.mxu0 0
    %977 = vmatpush1.bf16.msra.mxu0 0
    %978 = vmatprep.subr.bf16.mxu0 0
    %979 = vmatpush1.bf16.msra.mxu0 0
    %980 = vmatprep.subr.bf16.mxu0 0
    %981 = vmatpush1.bf16.msra.mxu0 0
    %982 = vmatprep.subr.bf16.mxu0 0
    %983 = vmatpush1.bf16.msra.mxu0 0
    %984 = vmatprep.subr.bf16.mxu0 0
    %985 = vmatpush1.bf16.msra.mxu0 0
    %986 = vmatprep.mubr.bf16.mxu0 0
    %987 = vmatmul.mubr.bf16.gmra.mrb[0].mxu0 %v949
    %v988 = vpop.f32.mrb[0].mxu0
    %v989 = vadd.f32 0.0, %v988
    %v990 = vpop.f32.mrb[0].mxu0
    %v991 = vpop.f32.mrb[0].mxu0
    %v992 = vpop.f32.mrb[0].mxu0
    %993 = vdwg.mxu0
    %v994 = vpack.c.bf16 %v989, %v941
    %996 = vrot.lane.b32.xlu0 %v994, 24
    %v997 = vpop.permute.xlu0 %996
    %vm999 = vcmask 261312
    %1000 = vst.msk [vmem:[#allocation2] sm:$0xff] %vm999, %v997
    %v1001 = vld [vmem:[#allocation2] sm:$0xff]
    %v1002 = vld [vmem:[%s2] sm:$0xf]
    %v1003 = vld [vmem:[%s2 + $0x4] sm:$0xf]
    %v1004 = vld [vmem:[%s2 + $0x8] sm:$0xf]
    %v1005 = vld [vmem:[%s2 + $0xc] sm:$0xf]
    %v1006 = vld [vmem:[%s5 + $0x1] sm:$0x1]
    %v1007 = vlaneseq
    %v1008 = vshrl.u32 %v1007, 7
    %v1009 = vsub.s32 0, %v1008
    %v1010 = vrot.slane %v1006, %v1009
    %v1015 = vunpack.c.l.b16 %v1002
    %v1016 = vunpack.c.l.b16 %v1003
    %v1017 = vunpack.c.l.b16 %v1004
    %v1018 = vunpack.c.l.b16 %v1005
    %v1019 = vpack.c.b16 %v1016, %v1015
    %v1020 = vpack.c.b16 %v1018, %v1017
    %v1024 = vsel %vm49, %v1001, 0
    %1026 = vmatprep.subr.bf16.mxu0 0
    %1027 = vmatpush1.bf16.msra.mxu0 %v1019
    %1028 = vmatprep.subr.bf16.mxu0 0
    %1029 = vmatpush1.bf16.msra.mxu0 %v1020
    %1030 = vmatprep.subr.bf16.mxu0 0
    %1031 = vmatpush1.bf16.msra.mxu0 0
    %1032 = vmatprep.subr.bf16.mxu0 0
    %1033 = vmatpush1.bf16.msra.mxu0 0
    %1034 = vmatprep.subr.bf16.mxu0 0
    %1035 = vmatpush1.bf16.msra.mxu0 0
    %1036 = vmatprep.subr.bf16.mxu0 0
    %1037 = vmatpush1.bf16.msra.mxu0 0
    %1038 = vmatprep.subr.bf16.mxu0 0
    %1039 = vmatpush1.bf16.msra.mxu0 0
    %1040 = vmatprep.subr.bf16.mxu0 0
    %1041 = vmatpush1.bf16.msra.mxu0 0
    %1042 = vmatprep.subr.bf16.mxu0 0
    %1043 = vmatpush1.bf16.msra.mxu0 0
    %1044 = vmatprep.subr.bf16.mxu0 0
    %1045 = vmatpush1.bf16.msra.mxu0 0
    %1046 = vmatprep.subr.bf16.mxu0 0
    %1047 = vmatpush1.bf16.msra.mxu0 0
    %1048 = vmatprep.subr.bf16.mxu0 0
    %1049 = vmatpush1.bf16.msra.mxu0 0
    %1050 = vmatprep.subr.bf16.mxu0 0
    %1051 = vmatpush1.bf16.msra.mxu0 0
    %1052 = vmatprep.subr.bf16.mxu0 0
    %1053 = vmatpush1.bf16.msra.mxu0 0
    %1054 = vmatprep.subr.bf16.mxu0 0
    %1055 = vmatpush1.bf16.msra.mxu0 0
    %1056 = vmatprep.subr.bf16.mxu0 0
    %1057 = vmatpush1.bf16.msra.mxu0 0
    %1058 = vmatprep.mubr.bf16.mxu0 0
    %1059 = vmatmul.mubr.bf16.gmra.mrb[0].mxu0 %v1024
    %v1060 = vpop.f32.mrb[0].mxu0
    %v1061 = vadd.f32 %v1010, %v1060
    %v1062 = vpop.f32.mrb[0].mxu0
    %v1063 = vpop.f32.mrb[0].mxu0
    %v1064 = vadd.f32 %v1010, %v1063
    %v1065 = vpop.f32.mrb[0].mxu0
    %1066 = vdwg.mxu0
    %v1067 = vadd.f32 %v25, %v1061
    %v1068 = vadd.f32 %v26, %v1064
    %v1069 = vsel %vm49, %v1067, 0.0
    %1070 = vadd.xlane.f32.xlu0 %v1069
    %v1071 = vpop.xlane.xlu0 %1070
    %v1072 = vsel %vm49, %v1068, 0.0
    %1073 = vadd.xlane.f32.xlu0 %v1072
    %v1074 = vpop.xlane.xlu0 %1073
    %v1075 = vrcp.pop 32.0
    %v1076 = vmul.f32 %v1071, %v1075
    %v1077 = vmul.f32 %v1074, %v1075
    %v1078 = vsub.f32 %v1067, %v1076
    %v1079 = vsub.f32 %v1068, %v1077
    %v1080 = vmul.f32 %v1078, %v1078
    %v1081 = vmul.f32 %v1079, %v1079
    %v1082 = vsel %vm49, %v1080, 0.0
    %1083 = vadd.xlane.f32.xlu0 %v1082
    %v1084 = vpop.xlane.xlu0 %1083
    %v1085 = vsel %vm49, %v1081, 0.0
    %1086 = vadd.xlane.f32.xlu0 %v1085
    %v1087 = vpop.xlane.xlu0 %1086
    %v1088 = vmul.f32 %v1084, %v1075
    %v1089 = vmul.f32 %v1087, %v1075
    %v1090 = vadd.f32 %v1088, 1e-12
    %v1091 = vadd.f32 %v1089, 1e-12
    %v1092 = vrsqrt.pop %v1090
    %v1093 = vrsqrt.pop %v1091
    %v1094 = vmul.f32 %v1078, %v1092
    %v1095 = vmul.f32 %v1079, %v1093
    %v1096 = vld [vmem:[%s5 + $0x2] sm:$0x1]
    %v1097 = vlaneseq
    %v1098 = vshrl.u32 %v1097, 7
    %v1099 = vsub.s32 0, %v1098
    %v1100 = vrot.slane %v1096, %v1099
    %v1101 = vmul.f32 %v1094, %v1100
    %v1102 = vmul.f32 %v1095, %v1100
    %v1103 = vld [vmem:[%s5 + $0x3] sm:$0x1]
    %v1104 = vlaneseq
    %v1105 = vshrl.u32 %v1104, 7
    %v1106 = vsub.s32 0, %v1105
    %v1107 = vrot.slane %v1103, %v1106
    %v1108 = vadd.f32 %v1101, %v1107
    %v1109 = vadd.f32 %v1102, %v1107
    %v1110 = vpack.c.bf16 %v1109, %v1108
    %v1111 = vld [vmem:[%s3] sm:$0xf]
    %v1112 = vld [vmem:[%s3 + $0x4] sm:$0xf]
    %v1113 = vld [vmem:[%s3 + $0x8] sm:$0xf]
    %v1114 = vld [vmem:[%s3 + $0xc] sm:$0xf]
    %v1115 = vld [vmem:[%s5 + $0x4] sm:$0x1]
    %v1116 = vlaneseq
    %v1117 = vshrl.u32 %v1116, 7
    %v1118 = vsub.s32 0, %v1117
    %v1119 = vrot.slane %v1115, %v1118
    %v1124 = vunpack.c.l.b16 %v1111
    %v1125 = vunpack.c.l.b16 %v1112
    %v1126 = vunpack.c.l.b16 %v1113
    %v1127 = vunpack.c.l.b16 %v1114
    %v1128 = vpack.c.b16 %v1125, %v1124
    %v1129 = vpack.c.b16 %v1127, %v1126
    %v1133 = vsel %vm49, %v1110, 0
    %1135 = vmatprep.subr.bf16.mxu0 0
    %1136 = vmatpush1.bf16.msra.mxu0 %v1128
    %1137 = vmatprep.subr.bf16.mxu0 0
    %1138 = vmatpush1.bf16.msra.mxu0 %v1129
    %1139 = vmatprep.subr.bf16.mxu0 0
    %1140 = vmatpush1.bf16.msra.mxu0 0
    %1141 = vmatprep.subr.bf16.mxu0 0
    %1142 = vmatpush1.bf16.msra.mxu0 0
    %1143 = vmatprep.subr.bf16.mxu0 0
    %1144 = vmatpush1.bf16.msra.mxu0 0
    %1145 = vmatprep.subr.bf16.mxu0 0
    %1146 = vmatpush1.bf16.msra.mxu0 0
    %1147 = vmatprep.subr.bf16.mxu0 0
    %1148 = vmatpush1.bf16.msra.mxu0 0
    %1149 = vmatprep.subr.bf16.mxu0 0
    %1150 = vmatpush1.bf16.msra.mxu0 0
    %1151 = vmatprep.subr.bf16.mxu0 0
    %1152 = vmatpush1.bf16.msra.mxu0 0
    %1153 = vmatprep.subr.bf16.mxu0 0
    %1154 = vmatpush1.bf16.msra.mxu0 0
    %1155 = vmatprep.subr.bf16.mxu0 0
    %1156 = vmatpush1.bf16.msra.mxu0 0
    %1157 = vmatprep.subr.bf16.mxu0 0
    %1158 = vmatpush1.bf16.msra.mxu0 0
    %1159 = vmatprep.subr.bf16.mxu0 0
    %1160 = vmatpush1.bf16.msra.mxu0 0
    %1161 = vmatprep.subr.bf16.mxu0 0
    %1162 = vmatpush1.bf16.msra.mxu0 0
    %1163 = vmatprep.subr.bf16.mxu0 0
    %1164 = vmatpush1.bf16.msra.mxu0 0
    %1165 = vmatprep.subr.bf16.mxu0 0
    %1166 = vmatpush1.bf16.msra.mxu0 0
    %1167 = vmatprep.mubr.bf16.mxu0 0
    %1168 = vmatmul.mubr.bf16.gmra.mrb[0].mxu0 %v1133
    %v1169 = vpop.f32.mrb[0].mxu0
    %v1170 = vadd.f32 %v1119, %v1169
    %v1171 = vpop.f32.mrb[0].mxu0
    %v1172 = vpop.f32.mrb[0].mxu0
    %v1173 = vadd.f32 %v1119, %v1172
    %v1174 = vpop.f32.mrb[0].mxu0
    %1175 = vdwg.mxu0
    %v1176 = vmul.f32 %v1170, %v1170
    %v1177 = vmul.f32 %v1173, %v1173
    %v1178 = vmul.f32 %v1170, %v1176
    %v1179 = vmul.f32 %v1173, %v1177
    %v1180 = vmul.f32 %v1178, 0.044715
    %v1181 = vmul.f32 %v1179, 0.044715
    %v1182 = vadd.f32 %v1170, %v1180
    %v1183 = vadd.f32 %v1173, %v1181
    %v1184 = vmul.f32 %v1182, 0.7978846
    %v1185 = vmul.f32 %v1183, 0.7978846
    %v1186 = vtanh.pop %v1184
    %v1187 = vtanh.pop %v1185
    %v1188 = vadd.f32 %v1186, 1.0
    %v1189 = vadd.f32 %v1187, 1.0
    %v1190 = vmul.f32 %v1188, 0.5
    %v1191 = vmul.f32 %v1189, 0.5
    %v1192 = vmul.f32 %v1170, %v1190
    %v1193 = vmul.f32 %v1173, %v1191
    %v1194 = vpack.c.bf16 %v1193, %v1192
    %v1195 = vld [vmem:[%s4] sm:$0xf]
    %v1196 = vld [vmem:[%s4 + $0x4] sm:$0xf]
    %v1197 = vld [vmem:[%s4 + $0x8] sm:$0xf]
    %v1198 = vld [vmem:[%s4 + $0xc] sm:$0xf]
    %v1199 = vld [vmem:[%s4 + $0x10] sm:$0xf]
    %v1200 = vld [vmem:[%s4 + $0x14] sm:$0xf]
    %v1201 = vld [vmem:[%s4 + $0x18] sm:$0xf]
    %v1202 = vld [vmem:[%s4 + $0x1c] sm:$0xf]
    %v1203 = vld [vmem:[%s4 + $0x20] sm:$0xf]
    %v1204 = vld [vmem:[%s4 + $0x24] sm:$0xf]
    %v1205 = vld [vmem:[%s4 + $0x28] sm:$0xf]
    %v1206 = vld [vmem:[%s4 + $0x2c] sm:$0xf]
    %v1207 = vld [vmem:[%s4 + $0x30] sm:$0xf]
    %v1208 = vld [vmem:[%s4 + $0x34] sm:$0xf]
    %v1209 = vld [vmem:[%s4 + $0x38] sm:$0xf]
    %v1210 = vld [vmem:[%s4 + $0x3c] sm:$0xf]
    %v1211 = vld [vmem:[%s5 + $0x5] sm:$0x1]
    %v1212 = vlaneseq
    %v1213 = vshrl.u32 %v1212, 7
    %v1214 = vsub.s32 0, %v1213
    %v1215 = vrot.slane %v1211, %v1214
    %v1232 = vunpack.c.l.b16 %v1195
    %v1233 = vunpack.c.l.b16 %v1196
    %v1234 = vunpack.c.l.b16 %v1197
    %v1235 = vunpack.c.l.b16 %v1198
    %v1236 = vunpack.c.l.b16 %v1199
    %v1237 = vunpack.c.l.b16 %v1200
    %v1238 = vunpack.c.l.b16 %v1201
    %v1239 = vunpack.c.l.b16 %v1202
    %v1240 = vunpack.c.l.b16 %v1203
    %v1241 = vunpack.c.l.b16 %v1204
    %v1242 = vunpack.c.l.b16 %v1205
    %v1243 = vunpack.c.l.b16 %v1206
    %v1244 = vunpack.c.l.b16 %v1207
    %v1245 = vunpack.c.l.b16 %v1208
    %v1246 = vunpack.c.l.b16 %v1209
    %v1247 = vunpack.c.l.b16 %v1210
    %v1248 = vpack.c.b16 %v1233, %v1232
    %v1249 = vpack.c.b16 %v1235, %v1234
    %v1250 = vpack.c.b16 %v1237, %v1236
    %v1251 = vpack.c.b16 %v1239, %v1238
    %v1252 = vpack.c.b16 %v1241, %v1240
    %v1253 = vpack.c.b16 %v1243, %v1242
    %v1254 = vpack.c.b16 %v1245, %v1244
    %v1255 = vpack.c.b16 %v1247, %v1246
    %1264 = vmatprep.subr.bf16.mxu0 0
    %1265 = vmatpush1.bf16.msra.mxu0 %v1248
    %1266 = vmatprep.subr.bf16.mxu0 0
    %1267 = vmatpush1.bf16.msra.mxu0 %v1249
    %1268 = vmatprep.subr.bf16.mxu0 0
    %1269 = vmatpush1.bf16.msra.mxu0 %v1250
    %1270 = vmatprep.subr.bf16.mxu0 0
    %1271 = vmatpush1.bf16.msra.mxu0 %v1251
    %1272 = vmatprep.subr.bf16.mxu0 0
    %1273 = vmatpush1.bf16.msra.mxu0 %v1252
    %1274 = vmatprep.subr.bf16.mxu0 0
    %1275 = vmatpush1.bf16.msra.mxu0 %v1253
    %1276 = vmatprep.subr.bf16.mxu0 0
    %1277 = vmatpush1.bf16.msra.mxu0 %v1254
    %1278 = vmatprep.subr.bf16.mxu0 0
    %1279 = vmatpush1.bf16.msra.mxu0 %v1255
    %1280 = vmatprep.subr.bf16.mxu0 0
    %1281 = vmatpush1.bf16.msra.mxu0 0
    %1282 = vmatprep.subr.bf16.mxu0 0
    %1283 = vmatpush1.bf16.msra.mxu0 0
    %1284 = vmatprep.subr.bf16.mxu0 0
    %1285 = vmatpush1.bf16.msra.mxu0 0
    %1286 = vmatprep.subr.bf16.mxu0 0
    %1287 = vmatpush1.bf16.msra.mxu0 0
    %1288 = vmatprep.subr.bf16.mxu0 0
    %1289 = vmatpush1.bf16.msra.mxu0 0
    %1290 = vmatprep.subr.bf16.mxu0 0
    %1291 = vmatpush1.bf16.msra.mxu0 0
    %1292 = vmatprep.subr.bf16.mxu0 0
    %1293 = vmatpush1.bf16.msra.mxu0 0
    %1294 = vmatprep.subr.bf16.mxu0 0
    %1295 = vmatpush1.bf16.msra.mxu0 0
    %1296 = vmatprep.mubr.bf16.mxu0 0
    %1297 = vmatmul.mubr.bf16.gmra.mrb[0].mxu0 %v1194
    %v1298 = vpop.f32.mrb[0].mxu0
    %v1299 = vadd.f32 %v1215, %v1298
    %v1300 = vpop.f32.mrb[0].mxu0
    %v1301 = vpop.f32.mrb[0].mxu0
    %v1302 = vadd.f32 %v1215, %v1301
    %v1303 = vpop.f32.mrb[0].mxu0
    %1304 = vdwg.mxu0
    %v1305 = vadd.f32 %v1108, %v1299
    %v1306 = vadd.f32 %v1109, %v1302
    %v1307 = vsel %vm49, %v1305, 0.0
    %1308 = vadd.xlane.f32.xlu0 %v1307
    %v1309 = vpop.xlane.xlu0 %1308
    %v1310 = vsel %vm49, %v1306, 0.0
    %1311 = vadd.xlane.f32.xlu0 %v1310
    %v1312 = vpop.xlane.xlu0 %1311
    %v1313 = vmul.f32 %v1309, %v1075
    %v1314 = vmul.f32 %v1312, %v1075
    %v1315 = vsub.f32 %v1305, %v1313
    %v1316 = vsub.f32 %v1306, %v1314
    %v1317 = vmul.f32 %v1315, %v1315
    %v1318 = vmul.f32 %v1316, %v1316
    %v1319 = vsel %vm49, %v1317, 0.0
    %1320 = vadd.xlane.f32.xlu0 %v1319
    %v1321 = vpop.xlane.xlu0 %1320
    %v1322 = vsel %vm49, %v1318, 0.0
    %1323 = vadd.xlane.f32.xlu0 %v1322
    %v1324 = vpop.xlane.xlu0 %1323
    %v1325 = vmul.f32 %v1321, %v1075
    %v1326 = vmul.f32 %v1324, %v1075
    %v1327 = vadd.f32 %v1325, 1e-12
    %v1328 = vadd.f32 %v1326, 1e-12
    %v1329 = vrsqrt.pop %v1327
    %v1330 = vrsqrt.pop %v1328
    %v1331 = vmul.f32 %v1315, %v1329
    %v1332 = vmul.f32 %v1316, %v1330
    %v1333 = vld [vmem:[%s5 + $0x6] sm:$0x1]
    %v1334 = vlaneseq
    %v1335 = vshrl.u32 %v1334, 7
    %v1336 = vsub.s32 0, %v1335
    %v1337 = vrot.slane %v1333, %v1336
    %v1338 = vmul.f32 %v1331, %v1337
    %v1339 = vmul.f32 %v1332, %v1337
    %v1340 = vld [vmem:[%s5 + $0x7] sm:$0x1]
    %v1341 = vlaneseq
    %v1342 = vshrl.u32 %v1341, 7
    %v1343 = vsub.s32 0, %v1342
    %v1344 = vrot.slane %v1340, %v1343
    %v1345 = vadd.f32 %v1338, %v1344
    %v1346 = vadd.f32 %v1339, %v1344
    %1347 = vst.msk [vmem:[#allocation3] sm:$0xff] %vm49, %v1345
    %1348 = vst.msk [vmem:[#allocation3 + $0x8] sm:$0xff] %vm49, %v1346
    // Predicated region
    $region26: #{tpu_custom_call.1} parent=1 // pred_check
      _
    $region27: #{tpu_custom_call.1} parent=1 // pred_check_branch
      %1350 = sbr.rel (0) target = $region29
    $region28: #{tpu_custom_call.1} parent=1 // pred_region
      %s1352 = ssub.s32 256, 256
      %1353 = vsyncadd [#allocation4], %s1352
      %s1354 = sshll.u32 [#allocation3], 4
      %s1355 = int_to_ptr.vmem [resolvable:$true] %s1354
      %1360 = dma.vmem_to_hbm [thread:$0]  %s1355, 256, %s6, [#allocation4], 128, 128, 8
    $region29: #{tpu_custom_call.1} parent=1 // pred_fallthru
      _
    // Predicated region
    $region30: #{tpu_custom_call.1} parent=1 // pred_check
      _
    $region31: #{tpu_custom_call.1} parent=1 // pred_check_branch
      %1362 = sbr.rel (0) target = $region33
    $region32: #{tpu_custom_call.1} parent=1 // pred_region
      %1363 = dma.done [#allocation4], 256
    $region33: #{tpu_custom_call.1} parent=1 // pred_fallthru
      _
    %1364 = vsyncpa [#allocation4], 1

</llo_original>
